<compile_context>
chip_gen: v5e
topology: v5e:2x2
jax: 0.10.0
libtpu: 0.0.40
codegen_flags: <defaults>
</compile_context>

<pallas_src>
import jax
import jax.numpy as jnp
from jax import lax
from jax.experimental import pallas as pl
from jax.experimental.pallas import tpu as pltpu


def _round_up(x, n):
    return ((x + n - 1) // n) * n


# --------------------------------------------------------------------------- #
# Kernel bodies
# --------------------------------------------------------------------------- #
def _idw_body(cdc_ref, data_ref, mask_ref,
              a1_ref, lp_ref, hp_ref, agg_ref, s_ref, i1_buf, rhs_fn):
    """Shared kernel body. rhs_fn(d) -> (T, 2T) exp weight tile for feature d."""
    m, bblk, T = data_ref.shape

    # Denominator (sum of lambda over features) accumulated in place.
    s_ref[...] = jnp.zeros_like(s_ref)

    for d in range(m):
        md = mask_ref[d]                                   # (bblk, T) leading-axis view
        xd = data_ref[d] * md                              # masked observations
        # Stacked LHS [masked-data rows ; mask rows] -> one MXU matmul yields
        # both Gaussian passes' influence and lambda sums for feature d.
        lhs = jnp.concatenate([xd, md], axis=0)            # (2*bblk, T)
        res = jnp.dot(lhs, rhs_fn(d), preferred_element_type=jnp.float32)  # (2*bblk, 2T)

        i1_d = res[:bblk, :T]                              # influence_each_dimension  (pass 1)
        a1_d = res[bblk:, :T]                              # influence_agg_weights     (pass 1)
        i2_d = res[:bblk, T:]                              # influence_each_dimension2 (pass 2)
        a2_d = res[bblk:, T:]                              # influence_agg_weights2    (pass 2)

        a1_ref[d] = a1_d
        s_ref[...] += a1_d                                 # running cross-dim denominator
        hp_ref[d] = i2_d / a2_d                            # ratio; low-pass subtracted below
        i1_buf[d] = i1_d                                   # only i1 is kept in scratch

    # Finalize: cross-dim mix (VPU scalar-broadcast accumulation; cdc is tiny),
    # low-pass, and high-pass.  (m^2 unrolled FMAs -- fine for small/mid m.)
    inv_den = 1.0 / s_ref[...]                             # (bblk, T), one divide reused
    for i in range(m):
        acc = cdc_ref[i] * i1_buf[0]                       # cdc[d, i] with d = 0
        for d in range(1, m):
            acc = acc + cdc_ref[d * m + i] * i1_buf[d]
        agg_ref[i] = acc
        lp_i = acc * inv_den
        lp_ref[i] = lp_i
        hp_ref[i] = hp_ref[i] - lp_i


def _idw_kernel_cached(cdc_ref, w_ref, data_ref, mask_ref,
                       a1_ref, lp_ref, hp_ref, agg_ref, s_ref, i1_buf):
    """Exp weight table precomputed in the wrapper, resident in VMEM."""
    _idw_body(cdc_ref, data_ref, mask_ref,
              a1_ref, lp_ref, hp_ref, agg_ref, s_ref, i1_buf,
              lambda d: w_ref[d])


def _idw_kernel_inline(cdc_ref, g1_ref, g2_ref, data_ref, mask_ref,
                       a1_ref, lp_ref, hp_ref, agg_ref, s_ref, i1_buf):
    """Fallback: exp weights recomputed per grid step (table too big for VMEM)."""
    T = data_ref.shape[2]
    jj = lax.broadcasted_iota(jnp.float32, (T, T), 0)      # source time j
    tt = lax.broadcasted_iota(jnp.float32, (T, T), 1)      # target time t
    neg_gap = -(((tt - jj) / 10.0) ** 2)                   # (T, T)

    def rhs(d):
        return jnp.exp(jnp.concatenate([neg_gap * g1_ref[d],
                                        neg_gap * g2_ref[d]], axis=1))

    _idw_body(cdc_ref, data_ref, mask_ref,
              a1_ref, lp_ref, hp_ref, agg_ref, s_ref, i1_buf, rhs)


# --------------------------------------------------------------------------- #
# Block-size / VMEM heuristics
# --------------------------------------------------------------------------- #
def _vmem_estimate_bytes(bblk, m, T, w_cached):
    f32 = 4
    blk = m * bblk * T * f32
    est = 2 * 2 * blk                      # data + mask input blocks (double-buffered)
    est += 4 * 2 * blk                     # a1 / lp / hp / agg output blocks (double-buffered)
    est += 2 * bblk * T * f32              # denominator output block
    est += blk                             # i1 scratch
    est += 10 * bblk * T * f32             # per-feature matmul operands / results / temps
    if w_cached:
        est += 2 * m * T * (2 * T) * f32   # resident exp weight table (assume 2 buffers)
    else:
        est += 4 * T * T * f32             # gap matrix + one (T, 2T) exp tile
    return est


def _pick_batch_block(b, m, T, budget, cache_w, two_cores, max_bblk):
    hi = max(8, min(_round_up(max_bblk, 8), _round_up(b, 8)))
    best = 8
    c = 8
    while c <= hi:                          # largest multiple of 8 that fits VMEM
        if _vmem_estimate_bytes(c, m, T, cache_w) <= budget:
            best = c
        c += 8
    if two_cores and b >= 16:
        # keep >= 2 grid steps so both TensorCores get work (v7x only)
        best = min(best, max(8, _round_up(-(-b // 2), 8)))
    # shrink to the smallest block giving the same step count (less batch padding)
    n_steps = -(-b // best)
    best = max(8, min(best, _round_up(-(-b // n_steps), 8)))
    return best


# --------------------------------------------------------------------------- #
# Wrapper
# --------------------------------------------------------------------------- #
def idw_forward(observed_data, observed_mask, k, log_gaussian_weight,
                log_cross_dim_coeff, *, max_batch_block=512, weight_cache=None):
    observed_data = observed_data.astype(jnp.float32)
    observed_mask = observed_mask.astype(jnp.float32)
    b, T, m = observed_data.shape

    # Parameter glue (softplus) — tiny XLA ops.
    g1 = jax.nn.softplus(log_gaussian_weight).astype(jnp.float32).reshape((m,))
    g2 = (jax.nn.softplus(k) + 1.0).astype(jnp.float32).reshape((m,))
    cdc_flat = jax.nn.softplus(log_cross_dim_coeff).astype(jnp.float32).reshape((m * m,))

    # Lane axis = time, padded to a multiple of 128 (lane-dense stores, aligned MXU dims).
    T_pad = _round_up(T, 128)

    # Generation-aware VMEM budget (v5e/v6e: 128 MiB per core, v7x: 64 MiB / 2 TCs).
    try:
        cap = int(getattr(pltpu.get_tpu_info(), "vmem_capacity_bytes", 64 * 2 ** 20))
    except Exception:
        cap = 64 * 2 ** 20
    cap = max(cap, 16 * 2 ** 20)
    two_cores = cap <= 96 * 2 ** 20          # v7x-like part: 2 TensorCores, 64 MiB VMEM/TC
    budget = int(0.60 * cap)

    # Cache the exp weight table only if it still allows a well-filled batch block.
    if weight_cache is None:
        cache_w = _vmem_estimate_bytes(min(64, _round_up(b, 8)), m, T_pad, True) <= budget
    else:
        cache_w = bool(weight_cache)

    bblk = _pick_batch_block(b, m, T_pad, budget, cache_w, two_cores, max_batch_block)
    n_steps = -(-b // bblk)
    b_pad = n_steps * bblk

    est = _vmem_estimate_bytes(bblk, m, T_pad, cache_w)
    vmem_limit = int(min(int(0.9 * cap), max(32 * 2 ** 20, 2 * est)))

    # Feature-leading layout (m, b, T): per-feature kernel access is a cheap
    # leading-axis view; pad batch/time so block shapes obey the (8, 128) rule.
    data_mb = jnp.transpose(observed_data, (2, 0, 1))
    mask_mb = jnp.transpose(observed_mask, (2, 0, 1))
    if b_pad != b or T_pad != T:
        pads = ((0, 0), (0, b_pad - b), (0, T_pad - T))
        data_mb = jnp.pad(data_mb, pads)
        mask_mb = jnp.pad(mask_mb, pads)     # padded rows/cols carry mask = 0

    fm_block = pl.BlockSpec((m, bblk, T_pad), lambda s: (0, s, 0))
    smem = pl.BlockSpec(memory_space=pltpu.MemorySpace.SMEM)

    out_shapes = (
        jax.ShapeDtypeStruct((m, b_pad, T_pad), jnp.float32),   # influence_agg_weights
        jax.ShapeDtypeStruct((m, b_pad, T_pad), jnp.float32),   # low_pass_res (feature-major)
        jax.ShapeDtypeStruct((m, b_pad, T_pad), jnp.float32),   # high_pass_res
        jax.ShapeDtypeStruct((m, b_pad, T_pad), jnp.float32),   # agg_influence (feature-major)
        jax.ShapeDtypeStruct((b_pad, T_pad), jnp.float32),      # cross-dim weight sum
    )
    out_specs = [fm_block, fm_block, fm_block, fm_block,
                 pl.BlockSpec((bblk, T_pad), lambda s: (s, 0))]
    scratch = [pltpu.VMEM((m, bblk, T_pad), jnp.float32)]        # i1 only

    if cache_w:
        # Grid-invariant exp weight table: [exp(-g1*gap) | exp(-g2*gap)], resident in VMEM.
        t = jnp.arange(T_pad, dtype=jnp.float32)
        gap = ((t[:, None] - t[None, :]) / 10.0) ** 2            # (T_pad, T_pad)
        w = jnp.exp(jnp.concatenate([-gap[None] * g1[:, None, None],
                                     -gap[None] * g2[:, None, None]], axis=2))
        kernel = _idw_kernel_cached
        in_specs = [smem,                                                    # cdc scalars
                    pl.BlockSpec((m, T_pad, 2 * T_pad), lambda s: (0, 0, 0)),  # exp table
                    fm_block, fm_block]
        args = (cdc_flat, w, data_mb, mask_mb)
    else:
        kernel = _idw_kernel_inline
        in_specs = [smem, smem, smem, fm_block, fm_block]
        args = (cdc_flat, g1, g2, data_mb, mask_mb)

    grid_spec = pltpu.PrefetchScalarGridSpec(
        num_scalar_prefetch=0,
        grid=(n_steps,),
        in_specs=in_specs,
        out_specs=out_specs,
        scratch_shapes=scratch)

    a1_p, lp_p, hp_p, agg_p, s_p = pl.pallas_call(
        kernel,
        out_shape=out_shapes,
        grid_spec=grid_spec,
        compiler_params=pltpu.CompilerParams(
            dimension_semantics=("parallel",),
            vmem_limit_bytes=vmem_limit),
    )(*args)

    # Layout plumbing back to the torch output conventions (slice off padding first).
    a1 = jnp.transpose(a1_p[:, :b, :T], (1, 0, 2))               # (b, m, T)
    hp = jnp.transpose(hp_p[:, :b, :T], (1, 0, 2))               # (b, m, T)
    lp = jnp.transpose(lp_p[:, :b, :T], (1, 2, 0))               # (b, T, m)
    agg = jnp.transpose(agg_p[:, :b, :T], (1, 2, 0))             # (b, T, m)
    s = s_p[:b, :T][..., None]                                   # (b, T, 1)
    return a1, lp, hp, agg, s


# --------------------------------------------------------------------------- #
# Pure-JAX reference (transcription of the PyTorch forward) and test
# --------------------------------------------------------------------------- #
def _reference(observed_data, observed_mask, k, log_gw, log_cdc):
    b, T, m = observed_data.shape
    g1 = jax.nn.softplus(log_gw)
    g2 = jax.nn.softplus(k) + 1.0
    cdc = jax.nn.softplus(log_cdc)
    t = jnp.arange(T, dtype=jnp.float32)
    gap = ((t[:, None] - t[None, :]) / 10.0) ** 2                 # (T, T)
    w1 = jnp.exp(-gap[None] * g1[:, None, None])                  # (m, j, t)
    w2 = jnp.exp(-gap[None] * g2[:, None, None])
    x = observed_data * observed_mask
    i1 = jnp.einsum('bjd,djt->bdt', x, w1)
    a1 = jnp.einsum('bjd,djt->bdt', observed_mask, w1)
    i2 = jnp.einsum('bjd,djt->bdt', x, w2)
    a2 = jnp.einsum('bjd,djt->bdt', observed_mask, w2)
    agg = jnp.einsum('di,bdt->bti', cdc, i1)                      # (b, T, m)
    s = jnp.sum(a1, axis=1)                                       # (b, T)
    lp = agg / s[:, :, None]
    hp = i2 / a2 - jnp.swapaxes(lp, 1, 2)
    return a1, lp, hp, agg, s[:, :, None]


if __name__ == "__main__":
    B, T_MAX, M = 2, 16, 4   # batch, T_max, dimension

    key = jax.random.PRNGKey(0)
    k_p, k_gw, k_cdc, k_data, k_mask = jax.random.split(key, 5)

    k_param = jax.random.uniform(k_p, (M,), jnp.float32)
    log_gaussian_weight = jax.random.uniform(k_gw, (M,), jnp.float32)
    log_cross_dim_coeff = jax.random.uniform(k_cdc, (M, M), jnp.float32)

    observed_data = jax.random.normal(k_data, (B, T_MAX, M), jnp.float32)
    observed_mask = (jax.random.uniform(k_mask, (B, T_MAX, M)) < 0.8).astype(jnp.float32)

    refs = _reference(observed_data, observed_mask,
                      k_param, log_gaussian_weight, log_cross_dim_coeff)

    # Validate both the cached-weight-table path (auto) and the in-kernel exp fallback.
    for force in (None, False):
        outs = idw_forward(observed_data, observed_mask, k_param,
                           log_gaussian_weight, log_cross_dim_coeff,
                           weight_cache=force)
        outs = jax.block_until_ready(outs)
        for o, r in zip(outs, refs):
            assert o.shape == r.shape, (o.shape, r.shape)
            assert jnp.allclose(o, r, rtol=1e-3, atol=1e-3)

    print("KERNEL_OK")
</pallas_src>

<mosaic_0001>
module attributes {stable_mosaic.version = 11 : i64} {
  func.func @_idw_kernel_cached(%arg0: i32, %arg1: memref<16xf32, #tpu.memory_space<smem>>, %arg2: memref<4x128x256xf32, #tpu.memory_space<vmem>>, %arg3: memref<4x8x128xf32, #tpu.memory_space<vmem>>, %arg4: memref<4x8x128xf32, #tpu.memory_space<vmem>>, %arg5: memref<4x8x128xf32, #tpu.memory_space<vmem>>, %arg6: memref<4x8x128xf32, #tpu.memory_space<vmem>>, %arg7: memref<4x8x128xf32, #tpu.memory_space<vmem>>, %arg8: memref<4x8x128xf32, #tpu.memory_space<vmem>>, %arg9: memref<8x128xf32, #tpu.memory_space<vmem>>, %arg10: memref<4x8x128xf32, #tpu.memory_space<vmem>>) attributes {dimension_semantics = [#tpu.dimension_semantics<parallel>], iteration_bounds = array<i64: 1>, scalar_prefetch = 0 : i64, scratch_operands = 1 : i64, tpu.core_type = #tpu.core_type<tc>, window_params = [{transform_indices = @transform_0, window_bounds = array<i64: 16>}, {pipeline_mode = #tpu.pipeline_mode<synchronous>, transform_indices = @transform_1, window_bounds = array<i64: 4, 128, 256>}, {transform_indices = @transform_2, window_bounds = array<i64: 4, 8, 128>}, {transform_indices = @transform_3, window_bounds = array<i64: 4, 8, 128>}, {transform_indices = @transform_4, window_bounds = array<i64: 4, 8, 128>}, {transform_indices = @transform_5, window_bounds = array<i64: 4, 8, 128>}, {transform_indices = @transform_6, window_bounds = array<i64: 4, 8, 128>}, {transform_indices = @transform_7, window_bounds = array<i64: 4, 8, 128>}, {transform_indices = @transform_8, window_bounds = array<i64: 8, 128>}]} {
    %cst = arith.constant 0.000000e+00 : f32
    %0 = vector.broadcast %cst : f32 to vector<8x128xf32>
    %c0 = arith.constant 0 : index
    %c0_0 = arith.constant 0 : index
    %1 = vector.load %arg9[%c0, %c0_0] : memref<8x128xf32, #tpu.memory_space<vmem>>, vector<8x128xf32>
    tpu.vector_store %arg9[%c0, %c0_0], %0 {strides = array<i32>} : memref<8x128xf32, #tpu.memory_space<vmem>>, vector<8x128xf32>,
    %c0_1 = arith.constant 0 : index
    %c0_2 = arith.constant 0 : index
    %c0_3 = arith.constant 0 : index
    %2 = vector.load %arg4[%c0_1, %c0_2, %c0_3] : memref<4x8x128xf32, #tpu.memory_space<vmem>>, vector<1x8x128xf32>
    %3 = vector.shape_cast %2 : vector<1x8x128xf32> to vector<8x128xf32>
    %c0_4 = arith.constant 0 : index
    %c0_5 = arith.constant 0 : index
    %c0_6 = arith.constant 0 : index
    %4 = vector.load %arg3[%c0_4, %c0_5, %c0_6] : memref<4x8x128xf32, #tpu.memory_space<vmem>>, vector<1x8x128xf32>
    %5 = vector.shape_cast %4 : vector<1x8x128xf32> to vector<8x128xf32>
    %6 = arith.mulf %5, %3 : vector<8x128xf32>
    %7 = tpu.concatenate %6, %3 in 0 : vector<8x128xf32>, vector<8x128xf32> -> vector<16x128xf32>
    %c0_7 = arith.constant 0 : index
    %c0_8 = arith.constant 0 : index
    %c0_9 = arith.constant 0 : index
    %8 = vector.load %arg2[%c0_7, %c0_8, %c0_9] : memref<4x128x256xf32, #tpu.memory_space<vmem>>, vector<1x128x256xf32>
    %9 = vector.shape_cast %8 : vector<1x128x256xf32> to vector<128x256xf32>
    %cst_10 = arith.constant dense<0.000000e+00> : vector<16x256xf32>
    %10 = tpu.matmul %7, %9, %cst_10 {dimension_numbers = #tpu.dot_dimension_numbers<[1], [0], [0], [1], [0, 0, 1, 1], [], []>} : vector<16x128xf32>, vector<128x256xf32>, vector<16x256xf32> -> vector<16x256xf32>
    %11 = vector.extract_strided_slice %10 {offsets = [0, 0], sizes = [8, 128], strides = [1, 1]} : vector<16x256xf32> to vector<8x128xf32>
    %12 = vector.extract_strided_slice %10 {offsets = [8, 0], sizes = [8, 128], strides = [1, 1]} : vector<16x256xf32> to vector<8x128xf32>
    %13 = vector.extract_strided_slice %10 {offsets = [0, 128], sizes = [8, 128], strides = [1, 1]} : vector<16x256xf32> to vector<8x128xf32>
    %14 = vector.extract_strided_slice %10 {offsets = [8, 128], sizes = [8, 128], strides = [1, 1]} : vector<16x256xf32> to vector<8x128xf32>
    %c0_11 = arith.constant 0 : index
    %c0_12 = arith.constant 0 : index
    %c0_13 = arith.constant 0 : index
    %15 = vector.load %arg5[%c0_11, %c0_12, %c0_13] : memref<4x8x128xf32, #tpu.memory_space<vmem>>, vector<1x8x128xf32>
    %16 = vector.shape_cast %15 : vector<1x8x128xf32> to vector<8x128xf32>
    %17 = vector.shape_cast %12 : vector<8x128xf32> to vector<1x8x128xf32>
    tpu.vector_store %arg5[%c0_11, %c0_12, %c0_13], %17 {strides = array<i32>} : memref<4x8x128xf32, #tpu.memory_space<vmem>>, vector<1x8x128xf32>,
    %c0_14 = arith.constant 0 : index
    %c0_15 = arith.constant 0 : index
    %18 = vector.load %arg9[%c0_14, %c0_15] : memref<8x128xf32, #tpu.memory_space<vmem>>, vector<8x128xf32>
    %19 = arith.addf %18, %12 : vector<8x128xf32>
    %c0_16 = arith.constant 0 : index
    %c0_17 = arith.constant 0 : index
    %20 = vector.load %arg9[%c0_16, %c0_17] : memref<8x128xf32, #tpu.memory_space<vmem>>, vector<8x128xf32>
    tpu.vector_store %arg9[%c0_16, %c0_17], %19 {strides = array<i32>} : memref<8x128xf32, #tpu.memory_space<vmem>>, vector<8x128xf32>,
    %21 = arith.divf %13, %14 : vector<8x128xf32>
    %c0_18 = arith.constant 0 : index
    %c0_19 = arith.constant 0 : index
    %c0_20 = arith.constant 0 : index
    %22 = vector.load %arg7[%c0_18, %c0_19, %c0_20] : memref<4x8x128xf32, #tpu.memory_space<vmem>>, vector<1x8x128xf32>
    %23 = vector.shape_cast %22 : vector<1x8x128xf32> to vector<8x128xf32>
    %24 = vector.shape_cast %21 : vector<8x128xf32> to vector<1x8x128xf32>
    tpu.vector_store %arg7[%c0_18, %c0_19, %c0_20], %24 {strides = array<i32>} : memref<4x8x128xf32, #tpu.memory_space<vmem>>, vector<1x8x128xf32>,
    %c0_21 = arith.constant 0 : index
    %c0_22 = arith.constant 0 : index
    %c0_23 = arith.constant 0 : index
    %25 = vector.load %arg10[%c0_21, %c0_22, %c0_23] : memref<4x8x128xf32, #tpu.memory_space<vmem>>, vector<1x8x128xf32>
    %26 = vector.shape_cast %25 : vector<1x8x128xf32> to vector<8x128xf32>
    %27 = vector.shape_cast %11 : vector<8x128xf32> to vector<1x8x128xf32>
    tpu.vector_store %arg10[%c0_21, %c0_22, %c0_23], %27 {strides = array<i32>} : memref<4x8x128xf32, #tpu.memory_space<vmem>>, vector<1x8x128xf32>,
    %c1 = arith.constant 1 : index
    %c0_24 = arith.constant 0 : index
    %c0_25 = arith.constant 0 : index
    %28 = vector.load %arg4[%c1, %c0_24, %c0_25] : memref<4x8x128xf32, #tpu.memory_space<vmem>>, vector<1x8x128xf32>
    %29 = vector.shape_cast %28 : vector<1x8x128xf32> to vector<8x128xf32>
    %c1_26 = arith.constant 1 : index
    %c0_27 = arith.constant 0 : index
    %c0_28 = arith.constant 0 : index
    %30 = vector.load %arg3[%c1_26, %c0_27, %c0_28] : memref<4x8x128xf32, #tpu.memory_space<vmem>>, vector<1x8x128xf32>
    %31 = vector.shape_cast %30 : vector<1x8x128xf32> to vector<8x128xf32>
    %32 = arith.mulf %31, %29 : vector<8x128xf32>
    %33 = tpu.concatenate %32, %29 in 0 : vector<8x128xf32>, vector<8x128xf32> -> vector<16x128xf32>
    %c1_29 = arith.constant 1 : index
    %c0_30 = arith.constant 0 : index
    %c0_31 = arith.constant 0 : index
    %34 = vector.load %arg2[%c1_29, %c0_30, %c0_31] : memref<4x128x256xf32, #tpu.memory_space<vmem>>, vector<1x128x256xf32>
    %35 = vector.shape_cast %34 : vector<1x128x256xf32> to vector<128x256xf32>
    %cst_32 = arith.constant dense<0.000000e+00> : vector<16x256xf32>
    %36 = tpu.matmul %33, %35, %cst_32 {dimension_numbers = #tpu.dot_dimension_numbers<[1], [0], [0], [1], [0, 0, 1, 1], [], []>} : vector<16x128xf32>, vector<128x256xf32>, vector<16x256xf32> -> vector<16x256xf32>
    %37 = vector.extract_strided_slice %36 {offsets = [0, 0], sizes = [8, 128], strides = [1, 1]} : vector<16x256xf32> to vector<8x128xf32>
    %38 = vector.extract_strided_slice %36 {offsets = [8, 0], sizes = [8, 128], strides = [1, 1]} : vector<16x256xf32> to vector<8x128xf32>
    %39 = vector.extract_strided_slice %36 {offsets = [0, 128], sizes = [8, 128], strides = [1, 1]} : vector<16x256xf32> to vector<8x128xf32>
    %40 = vector.extract_strided_slice %36 {offsets = [8, 128], sizes = [8, 128], strides = [1, 1]} : vector<16x256xf32> to vector<8x128xf32>
    %c1_33 = arith.constant 1 : index
    %c0_34 = arith.constant 0 : index
    %c0_35 = arith.constant 0 : index
    %41 = vector.load %arg5[%c1_33, %c0_34, %c0_35] : memref<4x8x128xf32, #tpu.memory_space<vmem>>, vector<1x8x128xf32>
    %42 = vector.shape_cast %41 : vector<1x8x128xf32> to vector<8x128xf32>
    %43 = vector.shape_cast %38 : vector<8x128xf32> to vector<1x8x128xf32>
    tpu.vector_store %arg5[%c1_33, %c0_34, %c0_35], %43 {strides = array<i32>} : memref<4x8x128xf32, #tpu.memory_space<vmem>>, vector<1x8x128xf32>,
    %c0_36 = arith.constant 0 : index
    %c0_37 = arith.constant 0 : index
    %44 = vector.load %arg9[%c0_36, %c0_37] : memref<8x128xf32, #tpu.memory_space<vmem>>, vector<8x128xf32>
    %45 = arith.addf %44, %38 : vector<8x128xf32>
    %c0_38 = arith.constant 0 : index
    %c0_39 = arith.constant 0 : index
    %46 = vector.load %arg9[%c0_38, %c0_39] : memref<8x128xf32, #tpu.memory_space<vmem>>, vector<8x128xf32>
    tpu.vector_store %arg9[%c0_38, %c0_39], %45 {strides = array<i32>} : memref<8x128xf32, #tpu.memory_space<vmem>>, vector<8x128xf32>,
    %47 = arith.divf %39, %40 : vector<8x128xf32>
    %c1_40 = arith.constant 1 : index
    %c0_41 = arith.constant 0 : index
    %c0_42 = arith.constant 0 : index
    %48 = vector.load %arg7[%c1_40, %c0_41, %c0_42] : memref<4x8x128xf32, #tpu.memory_space<vmem>>, vector<1x8x128xf32>
    %49 = vector.shape_cast %48 : vector<1x8x128xf32> to vector<8x128xf32>
    %50 = vector.shape_cast %47 : vector<8x128xf32> to vector<1x8x128xf32>
    tpu.vector_store %arg7[%c1_40, %c0_41, %c0_42], %50 {strides = array<i32>} : memref<4x8x128xf32, #tpu.memory_space<vmem>>, vector<1x8x128xf32>,
    %c1_43 = arith.constant 1 : index
    %c0_44 = arith.constant 0 : index
    %c0_45 = arith.constant 0 : index
    %51 = vector.load %arg10[%c1_43, %c0_44, %c0_45] : memref<4x8x128xf32, #tpu.memory_space<vmem>>, vector<1x8x128xf32>
    %52 = vector.shape_cast %51 : vector<1x8x128xf32> to vector<8x128xf32>
    %53 = vector.shape_cast %37 : vector<8x128xf32> to vector<1x8x128xf32>
    tpu.vector_store %arg10[%c1_43, %c0_44, %c0_45], %53 {strides = array<i32>} : memref<4x8x128xf32, #tpu.memory_space<vmem>>, vector<1x8x128xf32>,
    %c2 = arith.constant 2 : index
    %c0_46 = arith.constant 0 : index
    %c0_47 = arith.constant 0 : index
    %54 = vector.load %arg4[%c2, %c0_46, %c0_47] : memref<4x8x128xf32, #tpu.memory_space<vmem>>, vector<1x8x128xf32>
    %55 = vector.shape_cast %54 : vector<1x8x128xf32> to vector<8x128xf32>
    %c2_48 = arith.constant 2 : index
    %c0_49 = arith.constant 0 : index
    %c0_50 = arith.constant 0 : index
    %56 = vector.load %arg3[%c2_48, %c0_49, %c0_50] : memref<4x8x128xf32, #tpu.memory_space<vmem>>, vector<1x8x128xf32>
    %57 = vector.shape_cast %56 : vector<1x8x128xf32> to vector<8x128xf32>
    %58 = arith.mulf %57, %55 : vector<8x128xf32>
    %59 = tpu.concatenate %58, %55 in 0 : vector<8x128xf32>, vector<8x128xf32> -> vector<16x128xf32>
    %c2_51 = arith.constant 2 : index
    %c0_52 = arith.constant 0 : index
    %c0_53 = arith.constant 0 : index
    %60 = vector.load %arg2[%c2_51, %c0_52, %c0_53] : memref<4x128x256xf32, #tpu.memory_space<vmem>>, vector<1x128x256xf32>
    %61 = vector.shape_cast %60 : vector<1x128x256xf32> to vector<128x256xf32>
    %cst_54 = arith.constant dense<0.000000e+00> : vector<16x256xf32>
    %62 = tpu.matmul %59, %61, %cst_54 {dimension_numbers = #tpu.dot_dimension_numbers<[1], [0], [0], [1], [0, 0, 1, 1], [], []>} : vector<16x128xf32>, vector<128x256xf32>, vector<16x256xf32> -> vector<16x256xf32>
    %63 = vector.extract_strided_slice %62 {offsets = [0, 0], sizes = [8, 128], strides = [1, 1]} : vector<16x256xf32> to vector<8x128xf32>
    %64 = vector.extract_strided_slice %62 {offsets = [8, 0], sizes = [8, 128], strides = [1, 1]} : vector<16x256xf32> to vector<8x128xf32>
    %65 = vector.extract_strided_slice %62 {offsets = [0, 128], sizes = [8, 128], strides = [1, 1]} : vector<16x256xf32> to vector<8x128xf32>
    %66 = vector.extract_strided_slice %62 {offsets = [8, 128], sizes = [8, 128], strides = [1, 1]} : vector<16x256xf32> to vector<8x128xf32>
    %c2_55 = arith.constant 2 : index
    %c0_56 = arith.constant 0 : index
    %c0_57 = arith.constant 0 : index
    %67 = vector.load %arg5[%c2_55, %c0_56, %c0_57] : memref<4x8x128xf32, #tpu.memory_space<vmem>>, vector<1x8x128xf32>
    %68 = vector.shape_cast %67 : vector<1x8x128xf32> to vector<8x128xf32>
    %69 = vector.shape_cast %64 : vector<8x128xf32> to vector<1x8x128xf32>
    tpu.vector_store %arg5[%c2_55, %c0_56, %c0_57], %69 {strides = array<i32>} : memref<4x8x128xf32, #tpu.memory_space<vmem>>, vector<1x8x128xf32>,
    %c0_58 = arith.constant 0 : index
    %c0_59 = arith.constant 0 : index
    %70 = vector.load %arg9[%c0_58, %c0_59] : memref<8x128xf32, #tpu.memory_space<vmem>>, vector<8x128xf32>
    %71 = arith.addf %70, %64 : vector<8x128xf32>
    %c0_60 = arith.constant 0 : index
    %c0_61 = arith.constant 0 : index
    %72 = vector.load %arg9[%c0_60, %c0_61] : memref<8x128xf32, #tpu.memory_space<vmem>>, vector<8x128xf32>
    tpu.vector_store %arg9[%c0_60, %c0_61], %71 {strides = array<i32>} : memref<8x128xf32, #tpu.memory_space<vmem>>, vector<8x128xf32>,
    %73 = arith.divf %65, %66 : vector<8x128xf32>
    %c2_62 = arith.constant 2 : index
    %c0_63 = arith.constant 0 : index
    %c0_64 = arith.constant 0 : index
    %74 = vector.load %arg7[%c2_62, %c0_63, %c0_64] : memref<4x8x128xf32, #tpu.memory_space<vmem>>, vector<1x8x128xf32>
    %75 = vector.shape_cast %74 : vector<1x8x128xf32> to vector<8x128xf32>
    %76 = vector.shape_cast %73 : vector<8x128xf32> to vector<1x8x128xf32>
    tpu.vector_store %arg7[%c2_62, %c0_63, %c0_64], %76 {strides = array<i32>} : memref<4x8x128xf32, #tpu.memory_space<vmem>>, vector<1x8x128xf32>,
    %c2_65 = arith.constant 2 : index
    %c0_66 = arith.constant 0 : index
    %c0_67 = arith.constant 0 : index
    %77 = vector.load %arg10[%c2_65, %c0_66, %c0_67] : memref<4x8x128xf32, #tpu.memory_space<vmem>>, vector<1x8x128xf32>
    %78 = vector.shape_cast %77 : vector<1x8x128xf32> to vector<8x128xf32>
    %79 = vector.shape_cast %63 : vector<8x128xf32> to vector<1x8x128xf32>
    tpu.vector_store %arg10[%c2_65, %c0_66, %c0_67], %79 {strides = array<i32>} : memref<4x8x128xf32, #tpu.memory_space<vmem>>, vector<1x8x128xf32>,
    %c3 = arith.constant 3 : index
    %c0_68 = arith.constant 0 : index
    %c0_69 = arith.constant 0 : index
    %80 = vector.load %arg4[%c3, %c0_68, %c0_69] : memref<4x8x128xf32, #tpu.memory_space<vmem>>, vector<1x8x128xf32>
    %81 = vector.shape_cast %80 : vector<1x8x128xf32> to vector<8x128xf32>
    %c3_70 = arith.constant 3 : index
    %c0_71 = arith.constant 0 : index
    %c0_72 = arith.constant 0 : index
    %82 = vector.load %arg3[%c3_70, %c0_71, %c0_72] : memref<4x8x128xf32, #tpu.memory_space<vmem>>, vector<1x8x128xf32>
    %83 = vector.shape_cast %82 : vector<1x8x128xf32> to vector<8x128xf32>
    %84 = arith.mulf %83, %81 : vector<8x128xf32>
    %85 = tpu.concatenate %84, %81 in 0 : vector<8x128xf32>, vector<8x128xf32> -> vector<16x128xf32>
    %c3_73 = arith.constant 3 : index
    %c0_74 = arith.constant 0 : index
    %c0_75 = arith.constant 0 : index
    %86 = vector.load %arg2[%c3_73, %c0_74, %c0_75] : memref<4x128x256xf32, #tpu.memory_space<vmem>>, vector<1x128x256xf32>
    %87 = vector.shape_cast %86 : vector<1x128x256xf32> to vector<128x256xf32>
    %cst_76 = arith.constant dense<0.000000e+00> : vector<16x256xf32>
    %88 = tpu.matmul %85, %87, %cst_76 {dimension_numbers = #tpu.dot_dimension_numbers<[1], [0], [0], [1], [0, 0, 1, 1], [], []>} : vector<16x128xf32>, vector<128x256xf32>, vector<16x256xf32> -> vector<16x256xf32>
    %89 = vector.extract_strided_slice %88 {offsets = [0, 0], sizes = [8, 128], strides = [1, 1]} : vector<16x256xf32> to vector<8x128xf32>
    %90 = vector.extract_strided_slice %88 {offsets = [8, 0], sizes = [8, 128], strides = [1, 1]} : vector<16x256xf32> to vector<8x128xf32>
    %91 = vector.extract_strided_slice %88 {offsets = [0, 128], sizes = [8, 128], strides = [1, 1]} : vector<16x256xf32> to vector<8x128xf32>
    %92 = vector.extract_strided_slice %88 {offsets = [8, 128], sizes = [8, 128], strides = [1, 1]} : vector<16x256xf32> to vector<8x128xf32>
    %c3_77 = arith.constant 3 : index
    %c0_78 = arith.constant 0 : index
    %c0_79 = arith.constant 0 : index
    %93 = vector.load %arg5[%c3_77, %c0_78, %c0_79] : memref<4x8x128xf32, #tpu.memory_space<vmem>>, vector<1x8x128xf32>
    %94 = vector.shape_cast %93 : vector<1x8x128xf32> to vector<8x128xf32>
    %95 = vector.shape_cast %90 : vector<8x128xf32> to vector<1x8x128xf32>
    tpu.vector_store %arg5[%c3_77, %c0_78, %c0_79], %95 {strides = array<i32>} : memref<4x8x128xf32, #tpu.memory_space<vmem>>, vector<1x8x128xf32>,
    %c0_80 = arith.constant 0 : index
    %c0_81 = arith.constant 0 : index
    %96 = vector.load %arg9[%c0_80, %c0_81] : memref<8x128xf32, #tpu.memory_space<vmem>>, vector<8x128xf32>
    %97 = arith.addf %96, %90 : vector<8x128xf32>
    %c0_82 = arith.constant 0 : index
    %c0_83 = arith.constant 0 : index
    %98 = vector.load %arg9[%c0_82, %c0_83] : memref<8x128xf32, #tpu.memory_space<vmem>>, vector<8x128xf32>
    tpu.vector_store %arg9[%c0_82, %c0_83], %97 {strides = array<i32>} : memref<8x128xf32, #tpu.memory_space<vmem>>, vector<8x128xf32>,
    %99 = arith.divf %91, %92 : vector<8x128xf32>
    %c3_84 = arith.constant 3 : index
    %c0_85 = arith.constant 0 : index
    %c0_86 = arith.constant 0 : index
    %100 = vector.load %arg7[%c3_84, %c0_85, %c0_86] : memref<4x8x128xf32, #tpu.memory_space<vmem>>, vector<1x8x128xf32>
    %101 = vector.shape_cast %100 : vector<1x8x128xf32> to vector<8x128xf32>
    %102 = vector.shape_cast %99 : vector<8x128xf32> to vector<1x8x128xf32>
    tpu.vector_store %arg7[%c3_84, %c0_85, %c0_86], %102 {strides = array<i32>} : memref<4x8x128xf32, #tpu.memory_space<vmem>>, vector<1x8x128xf32>,
    %c3_87 = arith.constant 3 : index
    %c0_88 = arith.constant 0 : index
    %c0_89 = arith.constant 0 : index
    %103 = vector.load %arg10[%c3_87, %c0_88, %c0_89] : memref<4x8x128xf32, #tpu.memory_space<vmem>>, vector<1x8x128xf32>
    %104 = vector.shape_cast %103 : vector<1x8x128xf32> to vector<8x128xf32>
    %105 = vector.shape_cast %89 : vector<8x128xf32> to vector<1x8x128xf32>
    tpu.vector_store %arg10[%c3_87, %c0_88, %c0_89], %105 {strides = array<i32>} : memref<4x8x128xf32, #tpu.memory_space<vmem>>, vector<1x8x128xf32>,
    %c0_90 = arith.constant 0 : index
    %c0_91 = arith.constant 0 : index
    %106 = vector.load %arg9[%c0_90, %c0_91] : memref<8x128xf32, #tpu.memory_space<vmem>>, vector<8x128xf32>
    %cst_92 = arith.constant 1.000000e+00 : f32
    %107 = vector.broadcast %cst_92 : f32 to vector<8x128xf32>
    %108 = arith.divf %107, %106 : vector<8x128xf32>
    %c0_93 = arith.constant 0 : index
    %109 = memref.load %arg1[%c0_93] : memref<16xf32, #tpu.memory_space<smem>>
    %c0_94 = arith.constant 0 : index
    %c0_95 = arith.constant 0 : index
    %c0_96 = arith.constant 0 : index
    %110 = vector.load %arg10[%c0_94, %c0_95, %c0_96] : memref<4x8x128xf32, #tpu.memory_space<vmem>>, vector<1x8x128xf32>
    %111 = vector.shape_cast %110 : vector<1x8x128xf32> to vector<8x128xf32>
    %112 = vector.broadcast %109 : f32 to vector<8x128xf32>
    %113 = arith.mulf %112, %111 : vector<8x128xf32>
    %c4 = arith.constant 4 : index
    %114 = memref.load %arg1[%c4] : memref<16xf32, #tpu.memory_space<smem>>
    %c1_97 = arith.constant 1 : index
    %c0_98 = arith.constant 0 : index
    %c0_99 = arith.constant 0 : index
    %115 = vector.load %arg10[%c1_97, %c0_98, %c0_99] : memref<4x8x128xf32, #tpu.memory_space<vmem>>, vector<1x8x128xf32>
    %116 = vector.shape_cast %115 : vector<1x8x128xf32> to vector<8x128xf32>
    %117 = vector.broadcast %114 : f32 to vector<8x128xf32>
    %118 = arith.mulf %117, %116 : vector<8x128xf32>
    %119 = arith.addf %113, %118 : vector<8x128xf32>
    %c8 = arith.constant 8 : index
    %120 = memref.load %arg1[%c8] : memref<16xf32, #tpu.memory_space<smem>>
    %c2_100 = arith.constant 2 : index
    %c0_101 = arith.constant 0 : index
    %c0_102 = arith.constant 0 : index
    %121 = vector.load %arg10[%c2_100, %c0_101, %c0_102] : memref<4x8x128xf32, #tpu.memory_space<vmem>>, vector<1x8x128xf32>
    %122 = vector.shape_cast %121 : vector<1x8x128xf32> to vector<8x128xf32>
    %123 = vector.broadcast %120 : f32 to vector<8x128xf32>
    %124 = arith.mulf %123, %122 : vector<8x128xf32>
    %125 = arith.addf %119, %124 : vector<8x128xf32>
    %c12 = arith.constant 12 : index
    %126 = memref.load %arg1[%c12] : memref<16xf32, #tpu.memory_space<smem>>
    %c3_103 = arith.constant 3 : index
    %c0_104 = arith.constant 0 : index
    %c0_105 = arith.constant 0 : index
    %127 = vector.load %arg10[%c3_103, %c0_104, %c0_105] : memref<4x8x128xf32, #tpu.memory_space<vmem>>, vector<1x8x128xf32>
    %128 = vector.shape_cast %127 : vector<1x8x128xf32> to vector<8x128xf32>
    %129 = vector.broadcast %126 : f32 to vector<8x128xf32>
    %130 = arith.mulf %129, %128 : vector<8x128xf32>
    %131 = arith.addf %125, %130 : vector<8x128xf32>
    %c0_106 = arith.constant 0 : index
    %c0_107 = arith.constant 0 : index
    %c0_108 = arith.constant 0 : index
    %132 = vector.load %arg8[%c0_106, %c0_107, %c0_108] : memref<4x8x128xf32, #tpu.memory_space<vmem>>, vector<1x8x128xf32>
    %133 = vector.shape_cast %132 : vector<1x8x128xf32> to vector<8x128xf32>
    %134 = vector.shape_cast %131 : vector<8x128xf32> to vector<1x8x128xf32>
    tpu.vector_store %arg8[%c0_106, %c0_107, %c0_108], %134 {strides = array<i32>} : memref<4x8x128xf32, #tpu.memory_space<vmem>>, vector<1x8x128xf32>,
    %135 = arith.mulf %131, %108 : vector<8x128xf32>
    %c0_109 = arith.constant 0 : index
    %c0_110 = arith.constant 0 : index
    %c0_111 = arith.constant 0 : index
    %136 = vector.load %arg6[%c0_109, %c0_110, %c0_111] : memref<4x8x128xf32, #tpu.memory_space<vmem>>, vector<1x8x128xf32>
    %137 = vector.shape_cast %136 : vector<1x8x128xf32> to vector<8x128xf32>
    %138 = vector.shape_cast %135 : vector<8x128xf32> to vector<1x8x128xf32>
    tpu.vector_store %arg6[%c0_109, %c0_110, %c0_111], %138 {strides = array<i32>} : memref<4x8x128xf32, #tpu.memory_space<vmem>>, vector<1x8x128xf32>,
    %c0_112 = arith.constant 0 : index
    %c0_113 = arith.constant 0 : index
    %c0_114 = arith.constant 0 : index
    %139 = vector.load %arg7[%c0_112, %c0_113, %c0_114] : memref<4x8x128xf32, #tpu.memory_space<vmem>>, vector<1x8x128xf32>
    %140 = vector.shape_cast %139 : vector<1x8x128xf32> to vector<8x128xf32>
    %141 = arith.subf %140, %135 : vector<8x128xf32>
    %c0_115 = arith.constant 0 : index
    %c0_116 = arith.constant 0 : index
    %c0_117 = arith.constant 0 : index
    %142 = vector.load %arg7[%c0_115, %c0_116, %c0_117] : memref<4x8x128xf32, #tpu.memory_space<vmem>>, vector<1x8x128xf32>
    %143 = vector.shape_cast %142 : vector<1x8x128xf32> to vector<8x128xf32>
    %144 = vector.shape_cast %141 : vector<8x128xf32> to vector<1x8x128xf32>
    tpu.vector_store %arg7[%c0_115, %c0_116, %c0_117], %144 {strides = array<i32>} : memref<4x8x128xf32, #tpu.memory_space<vmem>>, vector<1x8x128xf32>,
    %c1_118 = arith.constant 1 : index
    %145 = memref.load %arg1[%c1_118] : memref<16xf32, #tpu.memory_space<smem>>
    %c0_119 = arith.constant 0 : index
    %c0_120 = arith.constant 0 : index
    %c0_121 = arith.constant 0 : index
    %146 = vector.load %arg10[%c0_119, %c0_120, %c0_121] : memref<4x8x128xf32, #tpu.memory_space<vmem>>, vector<1x8x128xf32>
    %147 = vector.shape_cast %146 : vector<1x8x128xf32> to vector<8x128xf32>
    %148 = vector.broadcast %145 : f32 to vector<8x128xf32>
    %149 = arith.mulf %148, %147 : vector<8x128xf32>
    %c5 = arith.constant 5 : index
    %150 = memref.load %arg1[%c5] : memref<16xf32, #tpu.memory_space<smem>>
    %c1_122 = arith.constant 1 : index
    %c0_123 = arith.constant 0 : index
    %c0_124 = arith.constant 0 : index
    %151 = vector.load %arg10[%c1_122, %c0_123, %c0_124] : memref<4x8x128xf32, #tpu.memory_space<vmem>>, vector<1x8x128xf32>
    %152 = vector.shape_cast %151 : vector<1x8x128xf32> to vector<8x128xf32>
    %153 = vector.broadcast %150 : f32 to vector<8x128xf32>
    %154 = arith.mulf %153, %152 : vector<8x128xf32>
    %155 = arith.addf %149, %154 : vector<8x128xf32>
    %c9 = arith.constant 9 : index
    %156 = memref.load %arg1[%c9] : memref<16xf32, #tpu.memory_space<smem>>
    %c2_125 = arith.constant 2 : index
    %c0_126 = arith.constant 0 : index
    %c0_127 = arith.constant 0 : index
    %157 = vector.load %arg10[%c2_125, %c0_126, %c0_127] : memref<4x8x128xf32, #tpu.memory_space<vmem>>, vector<1x8x128xf32>
    %158 = vector.shape_cast %157 : vector<1x8x128xf32> to vector<8x128xf32>
    %159 = vector.broadcast %156 : f32 to vector<8x128xf32>
    %160 = arith.mulf %159, %158 : vector<8x128xf32>
    %161 = arith.addf %155, %160 : vector<8x128xf32>
    %c13 = arith.constant 13 : index
    %162 = memref.load %arg1[%c13] : memref<16xf32, #tpu.memory_space<smem>>
    %c3_128 = arith.constant 3 : index
    %c0_129 = arith.constant 0 : index
    %c0_130 = arith.constant 0 : index
    %163 = vector.load %arg10[%c3_128, %c0_129, %c0_130] : memref<4x8x128xf32, #tpu.memory_space<vmem>>, vector<1x8x128xf32>
    %164 = vector.shape_cast %163 : vector<1x8x128xf32> to vector<8x128xf32>
    %165 = vector.broadcast %162 : f32 to vector<8x128xf32>
    %166 = arith.mulf %165, %164 : vector<8x128xf32>
    %167 = arith.addf %161, %166 : vector<8x128xf32>
    %c1_131 = arith.constant 1 : index
    %c0_132 = arith.constant 0 : index
    %c0_133 = arith.constant 0 : index
    %168 = vector.load %arg8[%c1_131, %c0_132, %c0_133] : memref<4x8x128xf32, #tpu.memory_space<vmem>>, vector<1x8x128xf32>
    %169 = vector.shape_cast %168 : vector<1x8x128xf32> to vector<8x128xf32>
    %170 = vector.shape_cast %167 : vector<8x128xf32> to vector<1x8x128xf32>
    tpu.vector_store %arg8[%c1_131, %c0_132, %c0_133], %170 {strides = array<i32>} : memref<4x8x128xf32, #tpu.memory_space<vmem>>, vector<1x8x128xf32>,
    %171 = arith.mulf %167, %108 : vector<8x128xf32>
    %c1_134 = arith.constant 1 : index
    %c0_135 = arith.constant 0 : index
    %c0_136 = arith.constant 0 : index
    %172 = vector.load %arg6[%c1_134, %c0_135, %c0_136] : memref<4x8x128xf32, #tpu.memory_space<vmem>>, vector<1x8x128xf32>
    %173 = vector.shape_cast %172 : vector<1x8x128xf32> to vector<8x128xf32>
    %174 = vector.shape_cast %171 : vector<8x128xf32> to vector<1x8x128xf32>
    tpu.vector_store %arg6[%c1_134, %c0_135, %c0_136], %174 {strides = array<i32>} : memref<4x8x128xf32, #tpu.memory_space<vmem>>, vector<1x8x128xf32>,
    %c1_137 = arith.constant 1 : index
    %c0_138 = arith.constant 0 : index
    %c0_139 = arith.constant 0 : index
    %175 = vector.load %arg7[%c1_137, %c0_138, %c0_139] : memref<4x8x128xf32, #tpu.memory_space<vmem>>, vector<1x8x128xf32>
    %176 = vector.shape_cast %175 : vector<1x8x128xf32> to vector<8x128xf32>
    %177 = arith.subf %176, %171 : vector<8x128xf32>
    %c1_140 = arith.constant 1 : index
    %c0_141 = arith.constant 0 : index
    %c0_142 = arith.constant 0 : index
    %178 = vector.load %arg7[%c1_140, %c0_141, %c0_142] : memref<4x8x128xf32, #tpu.memory_space<vmem>>, vector<1x8x128xf32>
    %179 = vector.shape_cast %178 : vector<1x8x128xf32> to vector<8x128xf32>
    %180 = vector.shape_cast %177 : vector<8x128xf32> to vector<1x8x128xf32>
    tpu.vector_store %arg7[%c1_140, %c0_141, %c0_142], %180 {strides = array<i32>} : memref<4x8x128xf32, #tpu.memory_space<vmem>>, vector<1x8x128xf32>,
    %c2_143 = arith.constant 2 : index
    %181 = memref.load %arg1[%c2_143] : memref<16xf32, #tpu.memory_space<smem>>
    %c0_144 = arith.constant 0 : index
    %c0_145 = arith.constant 0 : index
    %c0_146 = arith.constant 0 : index
    %182 = vector.load %arg10[%c0_144, %c0_145, %c0_146] : memref<4x8x128xf32, #tpu.memory_space<vmem>>, vector<1x8x128xf32>
    %183 = vector.shape_cast %182 : vector<1x8x128xf32> to vector<8x128xf32>
    %184 = vector.broadcast %181 : f32 to vector<8x128xf32>
    %185 = arith.mulf %184, %183 : vector<8x128xf32>
    %c6 = arith.constant 6 : index
    %186 = memref.load %arg1[%c6] : memref<16xf32, #tpu.memory_space<smem>>
    %c1_147 = arith.constant 1 : index
    %c0_148 = arith.constant 0 : index
    %c0_149 = arith.constant 0 : index
    %187 = vector.load %arg10[%c1_147, %c0_148, %c0_149] : memref<4x8x128xf32, #tpu.memory_space<vmem>>, vector<1x8x128xf32>
    %188 = vector.shape_cast %187 : vector<1x8x128xf32> to vector<8x128xf32>
    %189 = vector.broadcast %186 : f32 to vector<8x128xf32>
    %190 = arith.mulf %189, %188 : vector<8x128xf32>
    %191 = arith.addf %185, %190 : vector<8x128xf32>
    %c10 = arith.constant 10 : index
    %192 = memref.load %arg1[%c10] : memref<16xf32, #tpu.memory_space<smem>>
    %c2_150 = arith.constant 2 : index
    %c0_151 = arith.constant 0 : index
    %c0_152 = arith.constant 0 : index
    %193 = vector.load %arg10[%c2_150, %c0_151, %c0_152] : memref<4x8x128xf32, #tpu.memory_space<vmem>>, vector<1x8x128xf32>
    %194 = vector.shape_cast %193 : vector<1x8x128xf32> to vector<8x128xf32>
    %195 = vector.broadcast %192 : f32 to vector<8x128xf32>
    %196 = arith.mulf %195, %194 : vector<8x128xf32>
    %197 = arith.addf %191, %196 : vector<8x128xf32>
    %c14 = arith.constant 14 : index
    %198 = memref.load %arg1[%c14] : memref<16xf32, #tpu.memory_space<smem>>
    %c3_153 = arith.constant 3 : index
    %c0_154 = arith.constant 0 : index
    %c0_155 = arith.constant 0 : index
    %199 = vector.load %arg10[%c3_153, %c0_154, %c0_155] : memref<4x8x128xf32, #tpu.memory_space<vmem>>, vector<1x8x128xf32>
    %200 = vector.shape_cast %199 : vector<1x8x128xf32> to vector<8x128xf32>
    %201 = vector.broadcast %198 : f32 to vector<8x128xf32>
    %202 = arith.mulf %201, %200 : vector<8x128xf32>
    %203 = arith.addf %197, %202 : vector<8x128xf32>
    %c2_156 = arith.constant 2 : index
    %c0_157 = arith.constant 0 : index
    %c0_158 = arith.constant 0 : index
    %204 = vector.load %arg8[%c2_156, %c0_157, %c0_158] : memref<4x8x128xf32, #tpu.memory_space<vmem>>, vector<1x8x128xf32>
    %205 = vector.shape_cast %204 : vector<1x8x128xf32> to vector<8x128xf32>
    %206 = vector.shape_cast %203 : vector<8x128xf32> to vector<1x8x128xf32>
    tpu.vector_store %arg8[%c2_156, %c0_157, %c0_158], %206 {strides = array<i32>} : memref<4x8x128xf32, #tpu.memory_space<vmem>>, vector<1x8x128xf32>,
    %207 = arith.mulf %203, %108 : vector<8x128xf32>
    %c2_159 = arith.constant 2 : index
    %c0_160 = arith.constant 0 : index
    %c0_161 = arith.constant 0 : index
    %208 = vector.load %arg6[%c2_159, %c0_160, %c0_161] : memref<4x8x128xf32, #tpu.memory_space<vmem>>, vector<1x8x128xf32>
    %209 = vector.shape_cast %208 : vector<1x8x128xf32> to vector<8x128xf32>
    %210 = vector.shape_cast %207 : vector<8x128xf32> to vector<1x8x128xf32>
    tpu.vector_store %arg6[%c2_159, %c0_160, %c0_161], %210 {strides = array<i32>} : memref<4x8x128xf32, #tpu.memory_space<vmem>>, vector<1x8x128xf32>,
    %c2_162 = arith.constant 2 : index
    %c0_163 = arith.constant 0 : index
    %c0_164 = arith.constant 0 : index
    %211 = vector.load %arg7[%c2_162, %c0_163, %c0_164] : memref<4x8x128xf32, #tpu.memory_space<vmem>>, vector<1x8x128xf32>
    %212 = vector.shape_cast %211 : vector<1x8x128xf32> to vector<8x128xf32>
    %213 = arith.subf %212, %207 : vector<8x128xf32>
    %c2_165 = arith.constant 2 : index
    %c0_166 = arith.constant 0 : index
    %c0_167 = arith.constant 0 : index
    %214 = vector.load %arg7[%c2_165, %c0_166, %c0_167] : memref<4x8x128xf32, #tpu.memory_space<vmem>>, vector<1x8x128xf32>
    %215 = vector.shape_cast %214 : vector<1x8x128xf32> to vector<8x128xf32>
    %216 = vector.shape_cast %213 : vector<8x128xf32> to vector<1x8x128xf32>
    tpu.vector_store %arg7[%c2_165, %c0_166, %c0_167], %216 {strides = array<i32>} : memref<4x8x128xf32, #tpu.memory_space<vmem>>, vector<1x8x128xf32>,
    %c3_168 = arith.constant 3 : index
    %217 = memref.load %arg1[%c3_168] : memref<16xf32, #tpu.memory_space<smem>>
    %c0_169 = arith.constant 0 : index
    %c0_170 = arith.constant 0 : index
    %c0_171 = arith.constant 0 : index
    %218 = vector.load %arg10[%c0_169, %c0_170, %c0_171] : memref<4x8x128xf32, #tpu.memory_space<vmem>>, vector<1x8x128xf32>
    %219 = vector.shape_cast %218 : vector<1x8x128xf32> to vector<8x128xf32>
    %220 = vector.broadcast %217 : f32 to vector<8x128xf32>
    %221 = arith.mulf %220, %219 : vector<8x128xf32>
    %c7 = arith.constant 7 : index
    %222 = memref.load %arg1[%c7] : memref<16xf32, #tpu.memory_space<smem>>
    %c1_172 = arith.constant 1 : index
    %c0_173 = arith.constant 0 : index
    %c0_174 = arith.constant 0 : index
    %223 = vector.load %arg10[%c1_172, %c0_173, %c0_174] : memref<4x8x128xf32, #tpu.memory_space<vmem>>, vector<1x8x128xf32>
    %224 = vector.shape_cast %223 : vector<1x8x128xf32> to vector<8x128xf32>
    %225 = vector.broadcast %222 : f32 to vector<8x128xf32>
    %226 = arith.mulf %225, %224 : vector<8x128xf32>
    %227 = arith.addf %221, %226 : vector<8x128xf32>
    %c11 = arith.constant 11 : index
    %228 = memref.load %arg1[%c11] : memref<16xf32, #tpu.memory_space<smem>>
    %c2_175 = arith.constant 2 : index
    %c0_176 = arith.constant 0 : index
    %c0_177 = arith.constant 0 : index
    %229 = vector.load %arg10[%c2_175, %c0_176, %c0_177] : memref<4x8x128xf32, #tpu.memory_space<vmem>>, vector<1x8x128xf32>
    %230 = vector.shape_cast %229 : vector<1x8x128xf32> to vector<8x128xf32>
    %231 = vector.broadcast %228 : f32 to vector<8x128xf32>
    %232 = arith.mulf %231, %230 : vector<8x128xf32>
    %233 = arith.addf %227, %232 : vector<8x128xf32>
    %c15 = arith.constant 15 : index
    %234 = memref.load %arg1[%c15] : memref<16xf32, #tpu.memory_space<smem>>
    %c3_178 = arith.constant 3 : index
    %c0_179 = arith.constant 0 : index
    %c0_180 = arith.constant 0 : index
    %235 = vector.load %arg10[%c3_178, %c0_179, %c0_180] : memref<4x8x128xf32, #tpu.memory_space<vmem>>, vector<1x8x128xf32>
    %236 = vector.shape_cast %235 : vector<1x8x128xf32> to vector<8x128xf32>
    %237 = vector.broadcast %234 : f32 to vector<8x128xf32>
    %238 = arith.mulf %237, %236 : vector<8x128xf32>
    %239 = arith.addf %233, %238 : vector<8x128xf32>
    %c3_181 = arith.constant 3 : index
    %c0_182 = arith.constant 0 : index
    %c0_183 = arith.constant 0 : index
    %240 = vector.load %arg8[%c3_181, %c0_182, %c0_183] : memref<4x8x128xf32, #tpu.memory_space<vmem>>, vector<1x8x128xf32>
    %241 = vector.shape_cast %240 : vector<1x8x128xf32> to vector<8x128xf32>
    %242 = vector.shape_cast %239 : vector<8x128xf32> to vector<1x8x128xf32>
    tpu.vector_store %arg8[%c3_181, %c0_182, %c0_183], %242 {strides = array<i32>} : memref<4x8x128xf32, #tpu.memory_space<vmem>>, vector<1x8x128xf32>,
    %243 = arith.mulf %239, %108 : vector<8x128xf32>
    %c3_184 = arith.constant 3 : index
    %c0_185 = arith.constant 0 : index
    %c0_186 = arith.constant 0 : index
    %244 = vector.load %arg6[%c3_184, %c0_185, %c0_186] : memref<4x8x128xf32, #tpu.memory_space<vmem>>, vector<1x8x128xf32>
    %245 = vector.shape_cast %244 : vector<1x8x128xf32> to vector<8x128xf32>
    %246 = vector.shape_cast %243 : vector<8x128xf32> to vector<1x8x128xf32>
    tpu.vector_store %arg6[%c3_184, %c0_185, %c0_186], %246 {strides = array<i32>} : memref<4x8x128xf32, #tpu.memory_space<vmem>>, vector<1x8x128xf32>,
    %c3_187 = arith.constant 3 : index
    %c0_188 = arith.constant 0 : index
    %c0_189 = arith.constant 0 : index
    %247 = vector.load %arg7[%c3_187, %c0_188, %c0_189] : memref<4x8x128xf32, #tpu.memory_space<vmem>>, vector<1x8x128xf32>
    %248 = vector.shape_cast %247 : vector<1x8x128xf32> to vector<8x128xf32>
    %249 = arith.subf %248, %243 : vector<8x128xf32>
    %c3_190 = arith.constant 3 : index
    %c0_191 = arith.constant 0 : index
    %c0_192 = arith.constant 0 : index
    %250 = vector.load %arg7[%c3_190, %c0_191, %c0_192] : memref<4x8x128xf32, #tpu.memory_space<vmem>>, vector<1x8x128xf32>
    %251 = vector.shape_cast %250 : vector<1x8x128xf32> to vector<8x128xf32>
    %252 = vector.shape_cast %249 : vector<8x128xf32> to vector<1x8x128xf32>
    tpu.vector_store %arg7[%c3_190, %c0_191, %c0_192], %252 {strides = array<i32>} : memref<4x8x128xf32, #tpu.memory_space<vmem>>, vector<1x8x128xf32>,
    return
  }
  func.func @transform_0(%arg0: i32) -> i32 {
    %c0_i32 = arith.constant 0 : i32
    %c0_i32_0 = arith.constant 0 : i32
    return %c0_i32 : i32
  }
  func.func @transform_1(%arg0: i32) -> (i32, i32, i32) {
    %c0_i32 = arith.constant 0 : i32
    %c0_i32_0 = arith.constant 0 : i32
    %c0_i32_1 = arith.constant 0 : i32
    %c0_i32_2 = arith.constant 0 : i32
    return %c0_i32, %c0_i32_0, %c0_i32_1 : i32, i32, i32
  }
  func.func @transform_2(%arg0: i32) -> (i32, i32, i32) {
    %c0_i32 = arith.constant 0 : i32
    %c0_i32_0 = arith.constant 0 : i32
    %c0_i32_1 = arith.constant 0 : i32
    return %c0_i32, %arg0, %c0_i32_0 : i32, i32, i32
  }
  func.func @transform_3(%arg0: i32) -> (i32, i32, i32) {
    %c0_i32 = arith.constant 0 : i32
    %c0_i32_0 = arith.constant 0 : i32
    %c0_i32_1 = arith.constant 0 : i32
    return %c0_i32, %arg0, %c0_i32_0 : i32, i32, i32
  }
  func.func @transform_4(%arg0: i32) -> (i32, i32, i32) {
    %c0_i32 = arith.constant 0 : i32
    %c0_i32_0 = arith.constant 0 : i32
    %c0_i32_1 = arith.constant 0 : i32
    return %c0_i32, %arg0, %c0_i32_0 : i32, i32, i32
  }
  func.func @transform_5(%arg0: i32) -> (i32, i32, i32) {
    %c0_i32 = arith.constant 0 : i32
    %c0_i32_0 = arith.constant 0 : i32
    %c0_i32_1 = arith.constant 0 : i32
    return %c0_i32, %arg0, %c0_i32_0 : i32, i32, i32
  }
  func.func @transform_6(%arg0: i32) -> (i32, i32, i32) {
    %c0_i32 = arith.constant 0 : i32
    %c0_i32_0 = arith.constant 0 : i32
    %c0_i32_1 = arith.constant 0 : i32
    return %c0_i32, %arg0, %c0_i32_0 : i32, i32, i32
  }
  func.func @transform_7(%arg0: i32) -> (i32, i32, i32) {
    %c0_i32 = arith.constant 0 : i32
    %c0_i32_0 = arith.constant 0 : i32
    %c0_i32_1 = arith.constant 0 : i32
    return %c0_i32, %arg0, %c0_i32_0 : i32, i32, i32
  }
  func.func @transform_8(%arg0: i32) -> (i32, i32) {
    %c0_i32 = arith.constant 0 : i32
    %c0_i32_0 = arith.constant 0 : i32
    return %arg0, %c0_i32 : i32, i32
  }
}

</mosaic_0001>

<llo_original>
// kernel: tpu_custom_call.1
$region0: #{tpu_custom_call.1}
  #allocation0 [shape = 'u32[]', space=smem, size = 0x4, offset = 0x4, fixed_abs, tag = 'smem constant byte address 0x4 - core index']
  #allocation1 [shape = 'u32[72,128]{1,0:T(1,128)}', space=vmem, size = 0x9000, scoped, tag = 'internal scratch']
  #allocation2 [shape = 'f32[4,8,128]{2,1,0:T(8,128)}', space=vmem, size = 0x4000, scoped, tag = 'scratch operand']
  %s0 = inlined_call_operand.hbm [shape: f32[16], index: 0, kind: input, shape index: {}]
  %s1 = inlined_call_operand.hbm [shape: f32[4,128,256], index: 1, kind: input, shape index: {}]
  %s2 = inlined_call_operand.hbm [shape: f32[4,8,128], index: 2, kind: input, shape index: {}]
  %s3 = inlined_call_operand.hbm [shape: f32[4,8,128], index: 3, kind: input, shape index: {}]
  %s4 = inlined_call_operand.hbm [shape: f32[4,8,128], index: 4, kind: output, shape index: {0}]
  %s5 = inlined_call_operand.hbm [shape: f32[4,8,128], index: 5, kind: output, shape index: {1}]
  %s6 = inlined_call_operand.hbm [shape: f32[4,8,128], index: 6, kind: output, shape index: {2}]
  %s7 = inlined_call_operand.hbm [shape: f32[4,8,128], index: 7, kind: output, shape index: {3}]
  %s8 = inlined_call_operand.hbm [shape: f32[8,128], index: 8, kind: output, shape index: {4}]
  %9 = xla_tuple %s4, %s5, %s6, %s7, %s8
  %s10 = sld [smem:[#allocation0]]
  $region74: #{tpu_custom_call.1} parent=0
    _
  %s12 = ssub.s32 1, %s10
  %s13 = scalar_select 0, %s12, %s10
  $region1: #{tpu_custom_call.1} parent=0
    #allocation3 [shape = 'u8[512]{0}', space=smem, size = 0x200, scoped, tag = 'input window, operand 0, single buffered']
    #allocation4 [shape = 's32[1]{0}', space=sflag, size = 0x4, scoped, tag = 'scoped memory for tpu_custom_call.1']
    #allocation5 [shape = 's32[1]{0}', space=sflag, size = 0x4, scoped, tag = 'scoped memory for tpu_custom_call.1']
    #allocation6 [shape = 's32[1]{0}', space=sflag, size = 0x4, scoped, tag = 'scoped memory for tpu_custom_call.1']
    #allocation7 [shape = 'u8[524288]{0}', space=vmem, size = 0x80000, scoped, tag = 'input window, operand 1, single buffered']
    #allocation8 [shape = 'u8[16384]{0}', space=vmem, size = 0x4000, scoped, tag = 'input window, operand 2, single buffered']
    #allocation9 [shape = 's32[1]{0}', space=sflag, size = 0x4, scoped, tag = 'scoped memory for tpu_custom_call.1']
    #allocation10 [shape = 'u8[16384]{0}', space=vmem, size = 0x4000, scoped, tag = 'input window, operand 3, single buffered']
    #allocation11 [shape = 'u8[16384]{0}', space=vmem, size = 0x4000, scoped, tag = 'output window, operand 0, single buffered']
    #allocation12 [shape = 'u8[16384]{0}', space=vmem, size = 0x4000, scoped, tag = 'output window, operand 1, single buffered']
    #allocation13 [shape = 's32[1]{0}', space=sflag, size = 0x4, scoped, tag = 'scoped memory for tpu_custom_call.1']
    #allocation14 [shape = 'u8[16384]{0}', space=vmem, size = 0x4000, scoped, tag = 'output window, operand 2, single buffered']
    #allocation15 [shape = 'u8[16384]{0}', space=vmem, size = 0x4000, scoped, tag = 'output window, operand 3, single buffered']
    #allocation16 [shape = 's32[1]{0}', space=sflag, size = 0x4, scoped, tag = 'scoped memory for tpu_custom_call.1']
    #allocation17 [shape = 'u8[4096]{0}', space=vmem, size = 0x1000, scoped, tag = 'output window, operand 4, single buffered']
    %14 = vsyncpa [#allocation6], 0
    %15 = vsyncpa [#allocation4], 0
    %16 = vsyncpa [#allocation9], 0
    %17 = vsyncpa [#allocation5], 0
    %18 = vsyncpa [#allocation13], 0
    %19 = vsyncpa [#allocation16], 0
    // Predicated region
    $region2: #{tpu_custom_call.1} parent=1 // pred_check
      _
    $region3: #{tpu_custom_call.1} parent=1 // pred_check_branch
      %21 = sbr.rel (0) target = $region5
    $region4: #{tpu_custom_call.1} parent=1 // pred_region
      %23 = vsyncadd [#allocation6], 0
      %s25 = sshll.u32 %s0, 4
      %s26 = int_to_ptr.hbm [resolvable:$true] %s25
      %28 = dma.hbm_to_smem %s26, 16, [#allocation3], [#allocation6]
    $region5: #{tpu_custom_call.1} parent=1 // pred_fallthru
      _
    // Predicated region
    $region6: #{tpu_custom_call.1} parent=1 // pred_check
      _
    $region7: #{tpu_custom_call.1} parent=1 // pred_check_branch
      %30 = sbr.rel (0) target = $region9
    $region8: #{tpu_custom_call.1} parent=1 // pred_region
      %32 = vsyncadd [#allocation4], 0
      %s33 = sshll.u32 %s1, 4
      %s34 = int_to_ptr.hbm [resolvable:$true] %s33
      %s35 = sshll.u32 [#allocation7], 4
      %s36 = int_to_ptr.vmem [resolvable:$true] %s35
      %41 = dma.hbm_to_vmem [thread:$0]  %s34, 16384, %s36, [#allocation4], 256, 256, 16
    $region9: #{tpu_custom_call.1} parent=1 // pred_fallthru
      _
    // Predicated region
    $region10: #{tpu_custom_call.1} parent=1 // pred_check
      _
    $region11: #{tpu_custom_call.1} parent=1 // pred_check_branch
      %43 = sbr.rel (0) target = $region13
    $region12: #{tpu_custom_call.1} parent=1 // pred_region
      %45 = vsyncadd [#allocation9], 0
      %s46 = sshll.u32 %s2, 4
      %s47 = int_to_ptr.hbm [resolvable:$true] %s46
      %s48 = sshll.u32 [#allocation8], 4
      %s49 = int_to_ptr.vmem [resolvable:$true] %s48
      %54 = dma.hbm_to_vmem [thread:$0]  %s47, 512, %s49, [#allocation9], 128, 128, 8
    $region13: #{tpu_custom_call.1} parent=1 // pred_fallthru
      _
    // Predicated region
    $region14: #{tpu_custom_call.1} parent=1 // pred_check
      _
    $region15: #{tpu_custom_call.1} parent=1 // pred_check_branch
      %56 = sbr.rel (0) target = $region17
    $region16: #{tpu_custom_call.1} parent=1 // pred_region
      %58 = vsyncadd [#allocation9], 0
      %s59 = sshll.u32 %s3, 4
      %s60 = int_to_ptr.hbm [resolvable:$true] %s59
      %s61 = sshll.u32 [#allocation10], 4
      %s62 = int_to_ptr.vmem [resolvable:$true] %s61
      %67 = dma.hbm_to_vmem [thread:$0]  %s60, 512, %s62, [#allocation9], 128, 128, 8
    $region17: #{tpu_custom_call.1} parent=1 // pred_fallthru
      _
    // Predicated region
    $region18: #{tpu_custom_call.1} parent=1 // pred_check
      _
    $region19: #{tpu_custom_call.1} parent=1 // pred_check_branch
      %69 = sbr.rel (0) target = $region21
    $region20: #{tpu_custom_call.1} parent=1 // pred_region
      %71 = dma.done [#allocation6], 16
    $region21: #{tpu_custom_call.1} parent=1 // pred_fallthru
      _
    // Predicated region
    $region22: #{tpu_custom_call.1} parent=1 // pred_check
      _
    $region23: #{tpu_custom_call.1} parent=1 // pred_check_branch
      %73 = sbr.rel (0) target = $region25
    $region24: #{tpu_custom_call.1} parent=1 // pred_region
      %75 = dma.done [#allocation4], 16384
    $region25: #{tpu_custom_call.1} parent=1 // pred_fallthru
      _
    // Predicated region
    $region26: #{tpu_custom_call.1} parent=1 // pred_check
      _
    $region27: #{tpu_custom_call.1} parent=1 // pred_check_branch
      %77 = sbr.rel (0) target = $region29
    $region28: #{tpu_custom_call.1} parent=1 // pred_region
      %79 = dma.done [#allocation9], 512
    $region29: #{tpu_custom_call.1} parent=1 // pred_fallthru
      _
    // Predicated region
    $region30: #{tpu_custom_call.1} parent=1 // pred_check
      _
    $region31: #{tpu_custom_call.1} parent=1 // pred_check_branch
      %81 = sbr.rel (0) target = $region33
    $region32: #{tpu_custom_call.1} parent=1 // pred_region
      %83 = dma.done [#allocation9], 512
    $region33: #{tpu_custom_call.1} parent=1 // pred_fallthru
      _
    %84 = sfence
    %85 = vst [vmem:[#allocation17] sm:$0xff] 0.0
    %v86 = vld [vmem:[#allocation10] sm:$0xff]
    %v87 = vld [vmem:[#allocation8] sm:$0xff]
    %v88 = vmul.f32 %v87, %v86
    %v89 = vld [vmem:[#allocation7] sm:$0xff]
    %v90 = vld [vmem:[#allocation7 + $0x8] sm:$0xff]
    %v91 = vld [vmem:[#allocation7 + $0x10] sm:$0xff]
    %v92 = vld [vmem:[#allocation7 + $0x18] sm:$0xff]
    %v93 = vld [vmem:[#allocation7 + $0x20] sm:$0xff]
    %v94 = vld [vmem:[#allocation7 + $0x28] sm:$0xff]
    %v95 = vld [vmem:[#allocation7 + $0x30] sm:$0xff]
    %v96 = vld [vmem:[#allocation7 + $0x38] sm:$0xff]
    %v97 = vld [vmem:[#allocation7 + $0x40] sm:$0xff]
    %v98 = vld [vmem:[#allocation7 + $0x48] sm:$0xff]
    %v99 = vld [vmem:[#allocation7 + $0x50] sm:$0xff]
    %v100 = vld [vmem:[#allocation7 + $0x58] sm:$0xff]
    %v101 = vld [vmem:[#allocation7 + $0x60] sm:$0xff]
    %v102 = vld [vmem:[#allocation7 + $0x68] sm:$0xff]
    %v103 = vld [vmem:[#allocation7 + $0x70] sm:$0xff]
    %v104 = vld [vmem:[#allocation7 + $0x78] sm:$0xff]
    %v105 = vld [vmem:[#allocation7 + $0x80] sm:$0xff]
    %v106 = vld [vmem:[#allocation7 + $0x88] sm:$0xff]
    %v107 = vld [vmem:[#allocation7 + $0x90] sm:$0xff]
    %v108 = vld [vmem:[#allocation7 + $0x98] sm:$0xff]
    %v109 = vld [vmem:[#allocation7 + $0xa0] sm:$0xff]
    %v110 = vld [vmem:[#allocation7 + $0xa8] sm:$0xff]
    %v111 = vld [vmem:[#allocation7 + $0xb0] sm:$0xff]
    %v112 = vld [vmem:[#allocation7 + $0xb8] sm:$0xff]
    %v113 = vld [vmem:[#allocation7 + $0xc0] sm:$0xff]
    %v114 = vld [vmem:[#allocation7 + $0xc8] sm:$0xff]
    %v115 = vld [vmem:[#allocation7 + $0xd0] sm:$0xff]
    %v116 = vld [vmem:[#allocation7 + $0xd8] sm:$0xff]
    %v117 = vld [vmem:[#allocation7 + $0xe0] sm:$0xff]
    %v118 = vld [vmem:[#allocation7 + $0xe8] sm:$0xff]
    %v119 = vld [vmem:[#allocation7 + $0xf0] sm:$0xff]
    %v120 = vld [vmem:[#allocation7 + $0xf8] sm:$0xff]
    %121 = vmatpush.msra.mxu0 %v119
    %122 = vmatpush.msra.mxu0 %v117
    %123 = vmatpush.msra.mxu0 %v115
    %124 = vmatpush.msra.mxu0 %v113
    %125 = vmatpush.msra.mxu0 %v111
    %126 = vmatpush.msra.mxu0 %v109
    %127 = vmatpush.msra.mxu0 %v107
    %128 = vmatpush.msra.mxu0 %v105
    %129 = vmatpush.msra.mxu0 %v103
    %130 = vmatpush.msra.mxu0 %v101
    %131 = vmatpush.msra.mxu0 %v99
    %132 = vmatpush.msra.mxu0 %v97
    %133 = vmatpush.msra.mxu0 %v95
    %134 = vmatpush.msra.mxu0 %v93
    %135 = vmatpush.msra.mxu0 %v91
    %136 = vmatpush.msra.mxu0 %v89
    %137 = vmatmul.f32.gmra.mxu0 %v88
    %v138 = vpop.f32.mrf.mxu0
    %v139 = vadd.f32 0.0, %v138
    %140 = vmatmul.f32.gmra.mxu0 %v86
    %v141 = vpop.f32.mrf.mxu0
    %v142 = vadd.f32 0.0, %v141
    %143 = vdwg.mxu0
    %144 = vmatpush.msra.mxu0 %v120
    %145 = vmatpush.msra.mxu0 %v118
    %146 = vmatpush.msra.mxu0 %v116
    %147 = vmatpush.msra.mxu0 %v114
    %148 = vmatpush.msra.mxu0 %v112
    %149 = vmatpush.msra.mxu0 %v110
    %150 = vmatpush.msra.mxu0 %v108
    %151 = vmatpush.msra.mxu0 %v106
    %152 = vmatpush.msra.mxu0 %v104
    %153 = vmatpush.msra.mxu0 %v102
    %154 = vmatpush.msra.mxu0 %v100
    %155 = vmatpush.msra.mxu0 %v98
    %156 = vmatpush.msra.mxu0 %v96
    %157 = vmatpush.msra.mxu0 %v94
    %158 = vmatpush.msra.mxu0 %v92
    %159 = vmatpush.msra.mxu0 %v90
    %160 = vmatmul.f32.gmra.mxu0 %v88
    %v161 = vpop.f32.mrf.mxu0
    %v162 = vadd.f32 0.0, %v161
    %163 = vmatmul.f32.gmra.mxu0 %v86
    %v164 = vpop.f32.mrf.mxu0
    %v165 = vadd.f32 0.0, %v164
    %166 = vdwg.mxu0
    %167 = vst [vmem:[#allocation11] sm:$0xff] %v142
    %v168 = vld [vmem:[#allocation17] sm:$0xff]
    %v169 = vadd.f32 %v168, %v142
    %170 = vst [vmem:[#allocation17] sm:$0xff] %v169
    %v171 = vrcp.pop %v165
    %v172 = vmul.f32 %v165, %v171
    %v173 = vsub.f32 1.0, %v172
    %v174 = vmul.f32 %v171, %v173
    %v175 = vadd.f32 %v171, %v174
    %vm176 = vweird.f32 %v165
    %vm177 = vweird.f32 %v171
    %vm178 = vmor %vm176, %vm177
    %v179 = vsel %vm178, %v171, %v175
    %v180 = vand.u32 2147483647, %v165
    %vm181 = vcmp.eq.f32.partialorder %v180, 8.507059e+37
    %v182 = vand.u32 %v165, 2147483648
    %v183 = vor.u32 1.1754944e-38, %v182
    %v184 = vsel %vm181, %v183, %v179
    %v185 = vmul.f32 %v162, %v184
    %186 = vst [vmem:[#allocation14] sm:$0xff] %v185
    %187 = vst [vmem:[#allocation2] sm:$0xff] %v139
    %s188 = scalar_lea.vmem [#allocation10], 8
    %v189 = vld [vmem:[%s188] sm:$0xff]
    %s190 = scalar_lea.vmem [#allocation8], 8
    %v191 = vld [vmem:[%s190] sm:$0xff]
    %v192 = vmul.f32 %v191, %v189
    %s193 = scalar_lea.vmem [#allocation7], 256
    %v194 = vld [vmem:[%s193] sm:$0xff]
    %v195 = vld [vmem:[%s193 + $0x8] sm:$0xff]
    %v196 = vld [vmem:[%s193 + $0x10] sm:$0xff]
    %v197 = vld [vmem:[%s193 + $0x18] sm:$0xff]
    %v198 = vld [vmem:[%s193 + $0x20] sm:$0xff]
    %v199 = vld [vmem:[%s193 + $0x28] sm:$0xff]
    %v200 = vld [vmem:[%s193 + $0x30] sm:$0xff]
    %v201 = vld [vmem:[%s193 + $0x38] sm:$0xff]
    %v202 = vld [vmem:[%s193 + $0x40] sm:$0xff]
    %v203 = vld [vmem:[%s193 + $0x48] sm:$0xff]
    %v204 = vld [vmem:[%s193 + $0x50] sm:$0xff]
    %v205 = vld [vmem:[%s193 + $0x58] sm:$0xff]
    %v206 = vld [vmem:[%s193 + $0x60] sm:$0xff]
    %v207 = vld [vmem:[%s193 + $0x68] sm:$0xff]
    %v208 = vld [vmem:[%s193 + $0x70] sm:$0xff]
    %v209 = vld [vmem:[%s193 + $0x78] sm:$0xff]
    %v210 = vld [vmem:[%s193 + $0x80] sm:$0xff]
    %v211 = vld [vmem:[%s193 + $0x88] sm:$0xff]
    %v212 = vld [vmem:[%s193 + $0x90] sm:$0xff]
    %v213 = vld [vmem:[%s193 + $0x98] sm:$0xff]
    %v214 = vld [vmem:[%s193 + $0xa0] sm:$0xff]
    %v215 = vld [vmem:[%s193 + $0xa8] sm:$0xff]
    %v216 = vld [vmem:[%s193 + $0xb0] sm:$0xff]
    %v217 = vld [vmem:[%s193 + $0xb8] sm:$0xff]
    %v218 = vld [vmem:[%s193 + $0xc0] sm:$0xff]
    %v219 = vld [vmem:[%s193 + $0xc8] sm:$0xff]
    %v220 = vld [vmem:[%s193 + $0xd0] sm:$0xff]
    %v221 = vld [vmem:[%s193 + $0xd8] sm:$0xff]
    %v222 = vld [vmem:[%s193 + $0xe0] sm:$0xff]
    %v223 = vld [vmem:[%s193 + $0xe8] sm:$0xff]
    %v224 = vld [vmem:[%s193 + $0xf0] sm:$0xff]
    %v225 = vld [vmem:[%s193 + $0xf8] sm:$0xff]
    %226 = vmatpush.msra.mxu0 %v224
    %227 = vmatpush.msra.mxu0 %v222
    %228 = vmatpush.msra.mxu0 %v220
    %229 = vmatpush.msra.mxu0 %v218
    %230 = vmatpush.msra.mxu0 %v216
    %231 = vmatpush.msra.mxu0 %v214
    %232 = vmatpush.msra.mxu0 %v212
    %233 = vmatpush.msra.mxu0 %v210
    %234 = vmatpush.msra.mxu0 %v208
    %235 = vmatpush.msra.mxu0 %v206
    %236 = vmatpush.msra.mxu0 %v204
    %237 = vmatpush.msra.mxu0 %v202
    %238 = vmatpush.msra.mxu0 %v200
    %239 = vmatpush.msra.mxu0 %v198
    %240 = vmatpush.msra.mxu0 %v196
    %241 = vmatpush.msra.mxu0 %v194
    %242 = vmatmul.f32.gmra.mxu0 %v192
    %v243 = vpop.f32.mrf.mxu0
    %v244 = vadd.f32 0.0, %v243
    %245 = vmatmul.f32.gmra.mxu0 %v189
    %v246 = vpop.f32.mrf.mxu0
    %v247 = vadd.f32 0.0, %v246
    %248 = vdwg.mxu0
    %249 = vmatpush.msra.mxu0 %v225
    %250 = vmatpush.msra.mxu0 %v223
    %251 = vmatpush.msra.mxu0 %v221
    %252 = vmatpush.msra.mxu0 %v219
    %253 = vmatpush.msra.mxu0 %v217
    %254 = vmatpush.msra.mxu0 %v215
    %255 = vmatpush.msra.mxu0 %v213
    %256 = vmatpush.msra.mxu0 %v211
    %257 = vmatpush.msra.mxu0 %v209
    %258 = vmatpush.msra.mxu0 %v207
    %259 = vmatpush.msra.mxu0 %v205
    %260 = vmatpush.msra.mxu0 %v203
    %261 = vmatpush.msra.mxu0 %v201
    %262 = vmatpush.msra.mxu0 %v199
    %263 = vmatpush.msra.mxu0 %v197
    %264 = vmatpush.msra.mxu0 %v195
    %265 = vmatmul.f32.gmra.mxu0 %v192
    %v266 = vpop.f32.mrf.mxu0
    %v267 = vadd.f32 0.0, %v266
    %268 = vmatmul.f32.gmra.mxu0 %v189
    %v269 = vpop.f32.mrf.mxu0
    %v270 = vadd.f32 0.0, %v269
    %271 = vdwg.mxu0
    %s272 = scalar_lea.vmem [#allocation11], 8
    %273 = vst [vmem:[%s272] sm:$0xff] %v247
    %v274 = vld [vmem:[#allocation17] sm:$0xff]
    %v275 = vadd.f32 %v274, %v247
    %276 = vst [vmem:[#allocation17] sm:$0xff] %v275
    %v277 = vrcp.pop %v270
    %v278 = vmul.f32 %v270, %v277
    %v279 = vsub.f32 1.0, %v278
    %v280 = vmul.f32 %v277, %v279
    %v281 = vadd.f32 %v277, %v280
    %vm282 = vweird.f32 %v270
    %vm283 = vweird.f32 %v277
    %vm284 = vmor %vm282, %vm283
    %v285 = vsel %vm284, %v277, %v281
    %v286 = vand.u32 2147483647, %v270
    %vm287 = vcmp.eq.f32.partialorder %v286, 8.507059e+37
    %v288 = vand.u32 %v270, 2147483648
    %v289 = vor.u32 1.1754944e-38, %v288
    %v290 = vsel %vm287, %v289, %v285
    %v291 = vmul.f32 %v267, %v290
    %s292 = scalar_lea.vmem [#allocation14], 8
    %293 = vst [vmem:[%s292] sm:$0xff] %v291
    %s294 = scalar_lea.vmem [#allocation2], 8
    %295 = vst [vmem:[%s294] sm:$0xff] %v244
    %s296 = scalar_lea.vmem [#allocation10], 16
    %v297 = vld [vmem:[%s296] sm:$0xff]
    %s298 = scalar_lea.vmem [#allocation8], 16
    %v299 = vld [vmem:[%s298] sm:$0xff]
    %v300 = vmul.f32 %v299, %v297
    %s301 = scalar_lea.vmem [#allocation7], 512
    %v302 = vld [vmem:[%s301] sm:$0xff]
    %v303 = vld [vmem:[%s301 + $0x8] sm:$0xff]
    %v304 = vld [vmem:[%s301 + $0x10] sm:$0xff]
    %v305 = vld [vmem:[%s301 + $0x18] sm:$0xff]
    %v306 = vld [vmem:[%s301 + $0x20] sm:$0xff]
    %v307 = vld [vmem:[%s301 + $0x28] sm:$0xff]
    %v308 = vld [vmem:[%s301 + $0x30] sm:$0xff]
    %v309 = vld [vmem:[%s301 + $0x38] sm:$0xff]
    %v310 = vld [vmem:[%s301 + $0x40] sm:$0xff]
    %v311 = vld [vmem:[%s301 + $0x48] sm:$0xff]
    %v312 = vld [vmem:[%s301 + $0x50] sm:$0xff]
    %v313 = vld [vmem:[%s301 + $0x58] sm:$0xff]
    %v314 = vld [vmem:[%s301 + $0x60] sm:$0xff]
    %v315 = vld [vmem:[%s301 + $0x68] sm:$0xff]
    %v316 = vld [vmem:[%s301 + $0x70] sm:$0xff]
    %v317 = vld [vmem:[%s301 + $0x78] sm:$0xff]
    %v318 = vld [vmem:[%s301 + $0x80] sm:$0xff]
    %v319 = vld [vmem:[%s301 + $0x88] sm:$0xff]
    %v320 = vld [vmem:[%s301 + $0x90] sm:$0xff]
    %v321 = vld [vmem:[%s301 + $0x98] sm:$0xff]
    %v322 = vld [vmem:[%s301 + $0xa0] sm:$0xff]
    %v323 = vld [vmem:[%s301 + $0xa8] sm:$0xff]
    %v324 = vld [vmem:[%s301 + $0xb0] sm:$0xff]
    %v325 = vld [vmem:[%s301 + $0xb8] sm:$0xff]
    %v326 = vld [vmem:[%s301 + $0xc0] sm:$0xff]
    %v327 = vld [vmem:[%s301 + $0xc8] sm:$0xff]
    %v328 = vld [vmem:[%s301 + $0xd0] sm:$0xff]
    %v329 = vld [vmem:[%s301 + $0xd8] sm:$0xff]
    %v330 = vld [vmem:[%s301 + $0xe0] sm:$0xff]
    %v331 = vld [vmem:[%s301 + $0xe8] sm:$0xff]
    %v332 = vld [vmem:[%s301 + $0xf0] sm:$0xff]
    %v333 = vld [vmem:[%s301 + $0xf8] sm:$0xff]
    %334 = vmatpush.msra.mxu0 %v332
    %335 = vmatpush.msra.mxu0 %v330
    %336 = vmatpush.msra.mxu0 %v328
    %337 = vmatpush.msra.mxu0 %v326
    %338 = vmatpush.msra.mxu0 %v324
    %339 = vmatpush.msra.mxu0 %v322
    %340 = vmatpush.msra.mxu0 %v320
    %341 = vmatpush.msra.mxu0 %v318
    %342 = vmatpush.msra.mxu0 %v316
    %343 = vmatpush.msra.mxu0 %v314
    %344 = vmatpush.msra.mxu0 %v312
    %345 = vmatpush.msra.mxu0 %v310
    %346 = vmatpush.msra.mxu0 %v308
    %347 = vmatpush.msra.mxu0 %v306
    %348 = vmatpush.msra.mxu0 %v304
    %349 = vmatpush.msra.mxu0 %v302
    %350 = vmatmul.f32.gmra.mxu0 %v300
    %v351 = vpop.f32.mrf.mxu0
    %v352 = vadd.f32 0.0, %v351
    %353 = vmatmul.f32.gmra.mxu0 %v297
    %v354 = vpop.f32.mrf.mxu0
    %v355 = vadd.f32 0.0, %v354
    %356 = vdwg.mxu0
    %357 = vmatpush.msra.mxu0 %v333
    %358 = vmatpush.msra.mxu0 %v331
    %359 = vmatpush.msra.mxu0 %v329
    %360 = vmatpush.msra.mxu0 %v327
    %361 = vmatpush.msra.mxu0 %v325
    %362 = vmatpush.msra.mxu0 %v323
    %363 = vmatpush.msra.mxu0 %v321
    %364 = vmatpush.msra.mxu0 %v319
    %365 = vmatpush.msra.mxu0 %v317
    %366 = vmatpush.msra.mxu0 %v315
    %367 = vmatpush.msra.mxu0 %v313
    %368 = vmatpush.msra.mxu0 %v311
    %369 = vmatpush.msra.mxu0 %v309
    %370 = vmatpush.msra.mxu0 %v307
    %371 = vmatpush.msra.mxu0 %v305
    %372 = vmatpush.msra.mxu0 %v303
    %373 = vmatmul.f32.gmra.mxu0 %v300
    %v374 = vpop.f32.mrf.mxu0
    %v375 = vadd.f32 0.0, %v374
    %376 = vmatmul.f32.gmra.mxu0 %v297
    %v377 = vpop.f32.mrf.mxu0
    %v378 = vadd.f32 0.0, %v377
    %379 = vdwg.mxu0
    %s380 = scalar_lea.vmem [#allocation11], 16
    %381 = vst [vmem:[%s380] sm:$0xff] %v355
    %v382 = vld [vmem:[#allocation17] sm:$0xff]
    %v383 = vadd.f32 %v382, %v355
    %384 = vst [vmem:[#allocation17] sm:$0xff] %v383
    %v385 = vrcp.pop %v378
    %v386 = vmul.f32 %v378, %v385
    %v387 = vsub.f32 1.0, %v386
    %v388 = vmul.f32 %v385, %v387
    %v389 = vadd.f32 %v385, %v388
    %vm390 = vweird.f32 %v378
    %vm391 = vweird.f32 %v385
    %vm392 = vmor %vm390, %vm391
    %v393 = vsel %vm392, %v385, %v389
    %v394 = vand.u32 2147483647, %v378
    %vm395 = vcmp.eq.f32.partialorder %v394, 8.507059e+37
    %v396 = vand.u32 %v378, 2147483648
    %v397 = vor.u32 1.1754944e-38, %v396
    %v398 = vsel %vm395, %v397, %v393
    %v399 = vmul.f32 %v375, %v398
    %s400 = scalar_lea.vmem [#allocation14], 16
    %401 = vst [vmem:[%s400] sm:$0xff] %v399
    %s402 = scalar_lea.vmem [#allocation2], 16
    %403 = vst [vmem:[%s402] sm:$0xff] %v352
    %s404 = scalar_lea.vmem [#allocation10], 24
    %v405 = vld [vmem:[%s404] sm:$0xff]
    %s406 = scalar_lea.vmem [#allocation8], 24
    %v407 = vld [vmem:[%s406] sm:$0xff]
    %v408 = vmul.f32 %v407, %v405
    %s409 = scalar_lea.vmem [#allocation7], 768
    %v410 = vld [vmem:[%s409] sm:$0xff]
    %v411 = vld [vmem:[%s409 + $0x8] sm:$0xff]
    %v412 = vld [vmem:[%s409 + $0x10] sm:$0xff]
    %v413 = vld [vmem:[%s409 + $0x18] sm:$0xff]
    %v414 = vld [vmem:[%s409 + $0x20] sm:$0xff]
    %v415 = vld [vmem:[%s409 + $0x28] sm:$0xff]
    %v416 = vld [vmem:[%s409 + $0x30] sm:$0xff]
    %v417 = vld [vmem:[%s409 + $0x38] sm:$0xff]
    %v418 = vld [vmem:[%s409 + $0x40] sm:$0xff]
    %v419 = vld [vmem:[%s409 + $0x48] sm:$0xff]
    %v420 = vld [vmem:[%s409 + $0x50] sm:$0xff]
    %v421 = vld [vmem:[%s409 + $0x58] sm:$0xff]
    %v422 = vld [vmem:[%s409 + $0x60] sm:$0xff]
    %v423 = vld [vmem:[%s409 + $0x68] sm:$0xff]
    %v424 = vld [vmem:[%s409 + $0x70] sm:$0xff]
    %v425 = vld [vmem:[%s409 + $0x78] sm:$0xff]
    %v426 = vld [vmem:[%s409 + $0x80] sm:$0xff]
    %v427 = vld [vmem:[%s409 + $0x88] sm:$0xff]
    %v428 = vld [vmem:[%s409 + $0x90] sm:$0xff]
    %v429 = vld [vmem:[%s409 + $0x98] sm:$0xff]
    %v430 = vld [vmem:[%s409 + $0xa0] sm:$0xff]
    %v431 = vld [vmem:[%s409 + $0xa8] sm:$0xff]
    %v432 = vld [vmem:[%s409 + $0xb0] sm:$0xff]
    %v433 = vld [vmem:[%s409 + $0xb8] sm:$0xff]
    %v434 = vld [vmem:[%s409 + $0xc0] sm:$0xff]
    %v435 = vld [vmem:[%s409 + $0xc8] sm:$0xff]
    %v436 = vld [vmem:[%s409 + $0xd0] sm:$0xff]
    %v437 = vld [vmem:[%s409 + $0xd8] sm:$0xff]
    %v438 = vld [vmem:[%s409 + $0xe0] sm:$0xff]
    %v439 = vld [vmem:[%s409 + $0xe8] sm:$0xff]
    %v440 = vld [vmem:[%s409 + $0xf0] sm:$0xff]
    %v441 = vld [vmem:[%s409 + $0xf8] sm:$0xff]
    %442 = vmatpush.msra.mxu0 %v440
    %443 = vmatpush.msra.mxu0 %v438
    %444 = vmatpush.msra.mxu0 %v436
    %445 = vmatpush.msra.mxu0 %v434
    %446 = vmatpush.msra.mxu0 %v432
    %447 = vmatpush.msra.mxu0 %v430
    %448 = vmatpush.msra.mxu0 %v428
    %449 = vmatpush.msra.mxu0 %v426
    %450 = vmatpush.msra.mxu0 %v424
    %451 = vmatpush.msra.mxu0 %v422
    %452 = vmatpush.msra.mxu0 %v420
    %453 = vmatpush.msra.mxu0 %v418
    %454 = vmatpush.msra.mxu0 %v416
    %455 = vmatpush.msra.mxu0 %v414
    %456 = vmatpush.msra.mxu0 %v412
    %457 = vmatpush.msra.mxu0 %v410
    %458 = vmatmul.f32.gmra.mxu0 %v408
    %v459 = vpop.f32.mrf.mxu0
    %v460 = vadd.f32 0.0, %v459
    %461 = vmatmul.f32.gmra.mxu0 %v405
    %v462 = vpop.f32.mrf.mxu0
    %v463 = vadd.f32 0.0, %v462
    %464 = vdwg.mxu0
    %465 = vmatpush.msra.mxu0 %v441
    %466 = vmatpush.msra.mxu0 %v439
    %467 = vmatpush.msra.mxu0 %v437
    %468 = vmatpush.msra.mxu0 %v435
    %469 = vmatpush.msra.mxu0 %v433
    %470 = vmatpush.msra.mxu0 %v431
    %471 = vmatpush.msra.mxu0 %v429
    %472 = vmatpush.msra.mxu0 %v427
    %473 = vmatpush.msra.mxu0 %v425
    %474 = vmatpush.msra.mxu0 %v423
    %475 = vmatpush.msra.mxu0 %v421
    %476 = vmatpush.msra.mxu0 %v419
    %477 = vmatpush.msra.mxu0 %v417
    %478 = vmatpush.msra.mxu0 %v415
    %479 = vmatpush.msra.mxu0 %v413
    %480 = vmatpush.msra.mxu0 %v411
    %481 = vmatmul.f32.gmra.mxu0 %v408
    %v482 = vpop.f32.mrf.mxu0
    %v483 = vadd.f32 0.0, %v482
    %484 = vmatmul.f32.gmra.mxu0 %v405
    %v485 = vpop.f32.mrf.mxu0
    %v486 = vadd.f32 0.0, %v485
    %487 = vdwg.mxu0
    %s488 = scalar_lea.vmem [#allocation11], 24
    %489 = vst [vmem:[%s488] sm:$0xff] %v463
    %v490 = vld [vmem:[#allocation17] sm:$0xff]
    %v491 = vadd.f32 %v490, %v463
    %492 = vst [vmem:[#allocation17] sm:$0xff] %v491
    %v493 = vrcp.pop %v486
    %v494 = vmul.f32 %v486, %v493
    %v495 = vsub.f32 1.0, %v494
    %v496 = vmul.f32 %v493, %v495
    %v497 = vadd.f32 %v493, %v496
    %vm498 = vweird.f32 %v486
    %vm499 = vweird.f32 %v493
    %vm500 = vmor %vm498, %vm499
    %v501 = vsel %vm500, %v493, %v497
    %v502 = vand.u32 2147483647, %v486
    %vm503 = vcmp.eq.f32.partialorder %v502, 8.507059e+37
    %v504 = vand.u32 %v486, 2147483648
    %v505 = vor.u32 1.1754944e-38, %v504
    %v506 = vsel %vm503, %v505, %v501
    %v507 = vmul.f32 %v483, %v506
    %s508 = scalar_lea.vmem [#allocation14], 24
    %509 = vst [vmem:[%s508] sm:$0xff] %v507
    %s510 = scalar_lea.vmem [#allocation2], 24
    %511 = vst [vmem:[%s510] sm:$0xff] %v460
    %v512 = vld [vmem:[#allocation17] sm:$0xff]
    %v513 = vrcp.pop %v512
    %v514 = vmul.f32 %v512, %v513
    %v515 = vsub.f32 1.0, %v514
    %v516 = vmul.f32 %v513, %v515
    %v517 = vadd.f32 %v513, %v516
    %vm518 = vweird.f32 %v512
    %vm519 = vweird.f32 %v513
    %vm520 = vmor %vm518, %vm519
    %v521 = vsel %vm520, %v513, %v517
    %v522 = vand.u32 2147483647, %v512
    %vm523 = vcmp.eq.f32.partialorder %v522, 8.507059e+37
    %v524 = vand.u32 %v512, 2147483648
    %v525 = vor.u32 1.1754944e-38, %v524
    %v526 = vsel %vm523, %v525, %v521
    %v527 = vmul.f32 1.0, %v526
    %s528 = sld [smem:[#allocation3]]
    %v529 = vld [vmem:[#allocation2] sm:$0xff]
    %v530 = vstv %s528
    %v531 = vmul.f32 %v530, %v529
    %s532 = sld [smem:[#allocation3 + $0x4]]
    %v533 = vld [vmem:[%s294] sm:$0xff]
    %v534 = vstv %s532
    %v535 = vmul.f32 %v534, %v533
    %v536 = vadd.f32 %v531, %v535
    %s537 = sld [smem:[#allocation3 + $0x8]]
    %v538 = vld [vmem:[%s402] sm:$0xff]
    %v539 = vstv %s537
    %v540 = vmul.f32 %v539, %v538
    %v541 = vadd.f32 %v536, %v540
    %s542 = sld [smem:[#allocation3 + $0xc]]
    %v543 = vld [vmem:[%s510] sm:$0xff]
    %v544 = vstv %s542
    %v545 = vmul.f32 %v544, %v543
    %v546 = vadd.f32 %v541, %v545
    %547 = vst [vmem:[#allocation15] sm:$0xff] %v546
    %v548 = vmul.f32 %v546, %v527
    %549 = vst [vmem:[#allocation12] sm:$0xff] %v548
    %v550 = vld [vmem:[#allocation14] sm:$0xff]
    %v551 = vsub.f32 %v550, %v548
    %552 = vst [vmem:[#allocation14] sm:$0xff] %v551
    %s553 = sld [smem:[#allocation3 + $0x1]]
    %v554 = vld [vmem:[#allocation2] sm:$0xff]
    %v555 = vstv %s553
    %v556 = vmul.f32 %v555, %v554
    %s557 = sld [smem:[#allocation3 + $0x5]]
    %v558 = vld [vmem:[%s294] sm:$0xff]
    %v559 = vstv %s557
    %v560 = vmul.f32 %v559, %v558
    %v561 = vadd.f32 %v556, %v560
    %s562 = sld [smem:[#allocation3 + $0x9]]
    %v563 = vld [vmem:[%s402] sm:$0xff]
    %v564 = vstv %s562
    %v565 = vmul.f32 %v564, %v563
    %v566 = vadd.f32 %v561, %v565
    %s567 = sld [smem:[#allocation3 + $0xd]]
    %v568 = vld [vmem:[%s510] sm:$0xff]
    %v569 = vstv %s567
    %v570 = vmul.f32 %v569, %v568
    %v571 = vadd.f32 %v566, %v570
    %s572 = scalar_lea.vmem [#allocation15], 8
    %573 = vst [vmem:[%s572] sm:$0xff] %v571
    %v574 = vmul.f32 %v571, %v527
    %s575 = scalar_lea.vmem [#allocation12], 8
    %576 = vst [vmem:[%s575] sm:$0xff] %v574
    %v577 = vld [vmem:[%s292] sm:$0xff]
    %v578 = vsub.f32 %v577, %v574
    %579 = vst [vmem:[%s292] sm:$0xff] %v578
    %s580 = sld [smem:[#allocation3 + $0x2]]
    %v581 = vld [vmem:[#allocation2] sm:$0xff]
    %v582 = vstv %s580
    %v583 = vmul.f32 %v582, %v581
    %s584 = sld [smem:[#allocation3 + $0x6]]
    %v585 = vld [vmem:[%s294] sm:$0xff]
    %v586 = vstv %s584
    %v587 = vmul.f32 %v586, %v585
    %v588 = vadd.f32 %v583, %v587
    %s589 = sld [smem:[#allocation3 + $0xa]]
    %v590 = vld [vmem:[%s402] sm:$0xff]
    %v591 = vstv %s589
    %v592 = vmul.f32 %v591, %v590
    %v593 = vadd.f32 %v588, %v592
    %s594 = sld [smem:[#allocation3 + $0xe]]
    %v595 = vld [vmem:[%s510] sm:$0xff]
    %v596 = vstv %s594
    %v597 = vmul.f32 %v596, %v595
    %v598 = vadd.f32 %v593, %v597
    %s599 = scalar_lea.vmem [#allocation15], 16
    %600 = vst [vmem:[%s599] sm:$0xff] %v598
    %v601 = vmul.f32 %v598, %v527
    %s602 = scalar_lea.vmem [#allocation12], 16
    %603 = vst [vmem:[%s602] sm:$0xff] %v601
    %v604 = vld [vmem:[%s400] sm:$0xff]
    %v605 = vsub.f32 %v604, %v601
    %606 = vst [vmem:[%s400] sm:$0xff] %v605
    %s607 = sld [smem:[#allocation3 + $0x3]]
    %v608 = vld [vmem:[#allocation2] sm:$0xff]
    %v609 = vstv %s607
    %v610 = vmul.f32 %v609, %v608
    %s611 = sld [smem:[#allocation3 + $0x7]]
    %v612 = vld [vmem:[%s294] sm:$0xff]
    %v613 = vstv %s611
    %v614 = vmul.f32 %v613, %v612
    %v615 = vadd.f32 %v610, %v614
    %s616 = sld [smem:[#allocation3 + $0xb]]
    %v617 = vld [vmem:[%s402] sm:$0xff]
    %v618 = vstv %s616
    %v619 = vmul.f32 %v618, %v617
    %v620 = vadd.f32 %v615, %v619
    %s621 = sld [smem:[#allocation3 + $0xf]]
    %v622 = vld [vmem:[%s510] sm:$0xff]
    %v623 = vstv %s621
    %v624 = vmul.f32 %v623, %v622
    %v625 = vadd.f32 %v620, %v624
    %s626 = scalar_lea.vmem [#allocation15], 24
    %627 = vst [vmem:[%s626] sm:$0xff] %v625
    %v628 = vmul.f32 %v625, %v527
    %s629 = scalar_lea.vmem [#allocation12], 24
    %630 = vst [vmem:[%s629] sm:$0xff] %v628
    %v631 = vld [vmem:[%s508] sm:$0xff]
    %v632 = vsub.f32 %v631, %v628
    %633 = vst [vmem:[%s508] sm:$0xff] %v632
    // Predicated region
    $region34: #{tpu_custom_call.1} parent=1 // pred_check
      _
    $region35: #{tpu_custom_call.1} parent=1 // pred_check_branch
      %635 = sbr.rel (0) target = $region37
    $region36: #{tpu_custom_call.1} parent=1 // pred_region
      %637 = vsyncadd [#allocation5], 0
      %s638 = sshll.u32 [#allocation11], 4
      %s639 = int_to_ptr.vmem [resolvable:$true] %s638
      %s640 = sshll.u32 %s4, 4
      %s641 = int_to_ptr.hbm [resolvable:$true] %s640
      %646 = dma.vmem_to_hbm [thread:$0]  %s639, 512, %s641, [#allocation5], 128, 128, 8
    $region37: #{tpu_custom_call.1} parent=1 // pred_fallthru
      _
    // Predicated region
    $region38: #{tpu_custom_call.1} parent=1 // pred_check
      _
    $region39: #{tpu_custom_call.1} parent=1 // pred_check_branch
      %648 = sbr.rel (0) target = $region41
    $region40: #{tpu_custom_call.1} parent=1 // pred_region
      %650 = vsyncadd [#allocation13], 0
      %s651 = sshll.u32 [#allocation12], 4
      %s652 = int_to_ptr.vmem [resolvable:$true] %s651
      %s653 = sshll.u32 %s5, 4
      %s654 = int_to_ptr.hbm [resolvable:$true] %s653
      %659 = dma.vmem_to_hbm [thread:$0]  %s652, 512, %s654, [#allocation13], 128, 128, 8
    $region41: #{tpu_custom_call.1} parent=1 // pred_fallthru
      _
    // Predicated region
    $region42: #{tpu_custom_call.1} parent=1 // pred_check
      _
    $region43: #{tpu_custom_call.1} parent=1 // pred_check_branch
      %661 = sbr.rel (0) target = $region45
    $region44: #{tpu_custom_call.1} parent=1 // pred_region
      %663 = vsyncadd [#allocation13], 0
      %s664 = sshll.u32 [#allocation14], 4
      %s665 = int_to_ptr.vmem [resolvable:$true] %s664
      %s666 = sshll.u32 %s6, 4
      %s667 = int_to_ptr.hbm [resolvable:$true] %s666
      %672 = dma.vmem_to_hbm [thread:$0]  %s665, 512, %s667, [#allocation13], 128, 128, 8
    $region45: #{tpu_custom_call.1} parent=1 // pred_fallthru
      _
    // Predicated region
    $region46: #{tpu_custom_call.1} parent=1 // pred_check
      _
    $region47: #{tpu_custom_call.1} parent=1 // pred_check_branch
      %674 = sbr.rel (0) target = $region49
    $region48: #{tpu_custom_call.1} parent=1 // pred_region
      %676 = vsyncadd [#allocation16], 0
      %s677 = sshll.u32 [#allocation15], 4
      %s678 = int_to_ptr.vmem [resolvable:$true] %s677
      %s679 = sshll.u32 %s7, 4
      %s680 = int_to_ptr.hbm [resolvable:$true] %s679
      %685 = dma.vmem_to_hbm [thread:$0]  %s678, 512, %s680, [#allocation16], 128, 128, 8
    $region49: #{tpu_custom_call.1} parent=1 // pred_fallthru
      _
    // Predicated region
    $region50: #{tpu_custom_call.1} parent=1 // pred_check
      _
    $region51: #{tpu_custom_call.1} parent=1 // pred_check_branch
      %687 = sbr.rel (0) target = $region53
    $region52: #{tpu_custom_call.1} parent=1 // pred_region
      %689 = vsyncadd [#allocation16], 0
      %s691 = sshll.u32 [#allocation17], 4
      %s692 = int_to_ptr.vmem [resolvable:$true] %s691
      %s693 = sshll.u32 %s8, 4
      %s694 = int_to_ptr.hbm [resolvable:$true] %s693
      %696 = dma.vmem_to_hbm [thread:$0]  %s692, 128, %s694, [#allocation16]
    $region53: #{tpu_custom_call.1} parent=1 // pred_fallthru
      _
    // Predicated region
    $region54: #{tpu_custom_call.1} parent=1 // pred_check
      _
    $region55: #{tpu_custom_call.1} parent=1 // pred_check_branch
      %698 = sbr.rel (0) target = $region57
    $region56: #{tpu_custom_call.1} parent=1 // pred_region
      %700 = dma.done [#allocation5], 512
    $region57: #{tpu_custom_call.1} parent=1 // pred_fallthru
      _
    // Predicated region
    $region58: #{tpu_custom_call.1} parent=1 // pred_check
      _
    $region59: #{tpu_custom_call.1} parent=1 // pred_check_branch
      %702 = sbr.rel (0) target = $region61
    $region60: #{tpu_custom_call.1} parent=1 // pred_region
      %704 = dma.done [#allocation13], 512
    $region61: #{tpu_custom_call.1} parent=1 // pred_fallthru
      _
    // Predicated region
    $region62: #{tpu_custom_call.1} parent=1 // pred_check
      _
    $region63: #{tpu_custom_call.1} parent=1 // pred_check_branch
      %706 = sbr.rel (0) target = $region65
    $region64: #{tpu_custom_call.1} parent=1 // pred_region
      %708 = dma.done [#allocation13], 512
    $region65: #{tpu_custom_call.1} parent=1 // pred_fallthru
      _
    // Predicated region
    $region66: #{tpu_custom_call.1} parent=1 // pred_check
      _
    $region67: #{tpu_custom_call.1} parent=1 // pred_check_branch
      %710 = sbr.rel (0) target = $region69
    $region68: #{tpu_custom_call.1} parent=1 // pred_region
      %712 = dma.done [#allocation16], 512
    $region69: #{tpu_custom_call.1} parent=1 // pred_fallthru
      _
    // Predicated region
    $region70: #{tpu_custom_call.1} parent=1 // pred_check
      _
    $region71: #{tpu_custom_call.1} parent=1 // pred_check_branch
      %714 = sbr.rel (0) target = $region73
    $region72: #{tpu_custom_call.1} parent=1 // pred_region
      %716 = dma.done [#allocation16], 128
    $region73: #{tpu_custom_call.1} parent=1 // pred_fallthru
      _
    %717 = vsyncpa [#allocation4], 1
    %718 = vsyncpa [#allocation9], 1
    %719 = vsyncpa [#allocation5], 1
    %720 = vsyncpa [#allocation13], 1
    %721 = vsyncpa [#allocation16], 1
    %722 = vsyncpa [#allocation6], 1

</llo_original>
